<compile_context>
chip_gen: v7x
topology: tpu7x:2x2x1
jax: 0.10.0
libtpu: 0.0.40
codegen_flags: <defaults>
</compile_context>

<pallas_src>
import functools

import jax
import jax.numpy as jnp
from jax.experimental import pallas as pl
from jax.experimental.pallas import tpu as pltpu


def _t3(v):
    return (v, v, v) if isinstance(v, int) else tuple(v)


def _rup(x, m):
    return ((x + m - 1) // m) * m


def _vmem_limit(need_bytes):
    # Generation-aware VMEM cap: ~85% of physical (v7x has only 64 MiB/TC) so the
    # compiler keeps internal scratch/semaphore headroom; floor keeps pipelining roomy.
    try:
        phys = pltpu.get_tpu_info().vmem_capacity_bytes
    except Exception:
        phys = 64 * 2 ** 20
    cap = int(phys * 0.85)
    return int(min(cap, max(8 * 2 ** 20, 2 * need_bytes)))


def _conv_wide_k_kernel(x0_ref, x1_ref, w_ref, mask_ref, out_ref, stats_ref, a_ref,
                        *, tap_plan, tg, cin, k_used):
    # x0_ref/x1_ref: (1, P, 1, Cin, tg) bf16 -- spatial blocks j and j+1 of this sample
    # w_ref:         (Cout, Kp)        bf16 -- tap-major packed weights (zero K-padding)
    # mask_ref:      (1, tg)           f32  -- 1.0 on valid (non-overcomputed) positions
    # out_ref:       (1, Cout, tg)     f32  -- conv output block (lane-dense)
    # stats_ref:     (1, Cout, 2)      f32  -- per-sample [sum, sum_sq], accumulated over j
    # a_ref:         (Kp, tg)          bf16 -- stacked activation operand (VMEM scratch)
    j = pl.program_id(1)

    # Stack the K3 shifted tap windows along the contraction (sublane) axis so the whole
    # conv reduces to ONE wide-K GEMM (K = K3*Cin) instead of K3 tiny-K dots + f32 adds.
    for phase, taps in tap_plan:                       # static (trace-time) loops
        b0 = x0_ref[0, phase, 0]                       # (Cin, tg)
        b1 = x1_ref[0, phase, 0]                       # (Cin, tg)
        win = jnp.concatenate([b0, b1], axis=-1)       # (Cin, 2*tg)
        for t_idx, off in taps:
            a_ref[t_idx * cin:(t_idx + 1) * cin, :] = win[:, off:off + tg]
    pad = a_ref.shape[0] - k_used
    if pad:                                            # keep zero-weight pad rows finite
        a_ref[k_used:, :] = jnp.zeros((pad, tg), jnp.bfloat16)

    acc = jnp.dot(w_ref[...], a_ref[...], preferred_element_type=jnp.float32)  # (Cout, tg)
    out_ref[0] = acc

    # BN partial statistics, masked to valid positions, accumulated across j in the
    # resident output block -> one small HBM write per sample (not per block).
    am = acc * mask_ref[...]
    s1 = jnp.sum(am, axis=1, keepdims=True)            # (Cout, 1)
    s2 = jnp.sum(am * acc, axis=1, keepdims=True)      # mask is 0/1 -> am*acc == am*am

    @pl.when(j == 0)
    def _():
        stats_ref[...] = jnp.zeros_like(stats_ref)

    stats_ref[...] += jnp.concatenate([s1, s2], axis=1)[None]


def _bn_relu_kernel(y_ref, mean_ref, inv_ref, o_ref):
    # y_ref/o_ref: (1, Cout, chunk) f32; mean_ref/inv_ref: (Cout, 1) f32 (gamma=1, beta=0)
    o_ref[...] = jnp.maximum((y_ref[...] - mean_ref[...]) * inv_ref[...], 0.0)


def conv3d_bn_relu(x, weight, bias=None, *, stride=1, padding=0, dilation=1,
                   eps=1e-5, tile_g=1024):
    """PyTorch-style Conv3d (groups=1) + BatchNorm3d (training batch stats, gamma=1,
    beta=0) + ReLU.  x: (N, Cin, D, H, W); weight: (Cout, Cin, kD, kH, kW).
    `bias` is accepted but not added: it is exactly cancelled by the batch norm.
    Returns (N, Cout, Do, Ho, Wo) float32."""
    # TODO(synk): groups != 1, batch_norm=False and non-ReLU activations not implemented.
    N, Cin, D, H, W = x.shape
    Cout, Cin_w, kD, kH, kW = weight.shape
    assert Cin_w == Cin, "groups != 1 not supported"
    sD, sH, sW = _t3(stride)
    pD, pH, pW = _t3(padding)
    dD, dH, dW = _t3(dilation)

    def _osz(sz, k, s, p, d):
        return (sz + 2 * p - d * (k - 1) - 1) // s + 1

    Do, Ho, Wo = _osz(D, kD, sD, pD, dD), _osz(H, kH, sH, pH, dH), _osz(W, kW, sW, pW, dW)
    assert Do > 0 and Ho > 0 and Wo > 0

    qd_max = (dD * (kD - 1)) // sD
    qh_max = (dH * (kH - 1)) // sH
    qw_max = (dW * (kW - 1)) // sW
    Dq, Hq, Wq = Do + qd_max, Ho + qh_max, Wo + qw_max
    P = sD * sH * sW
    K3 = kD * kH * kW

    # ---- XLA glue (input-sized, bf16): pad, phase-decompose by stride, flatten the
    # ---- spatial dims and block the flattened axis into NB tiles of width tg. --------
    LD, LH, LW = sD * Dq, sH * Hq, sW * Wq
    xb = x.astype(jnp.bfloat16)                           # halve glue + DMA bytes up front
    xp = jnp.pad(xb, ((0, 0), (0, 0),
                      (pD, max(0, LD - D - pD)),
                      (pH, max(0, LH - H - pH)),
                      (pW, max(0, LW - W - pW))))[:, :, :LD, :LH, :LW]
    xp = xp.reshape(N, Cin, Dq, sD, Hq, sH, Wq, sW)
    xp = xp.transpose(0, 3, 5, 7, 1, 2, 4, 6)             # (N, sD, sH, sW, Cin, Dq, Hq, Wq)
    xf = xp.reshape(N, P, Cin, Dq * Hq * Wq)

    G_out = Do * Hq * Wq                                  # flattened (over-computed) extent
    off_max = (qd_max * Hq + qh_max) * Wq + qw_max
    tg = min(tile_g, _rup(G_out, 128))
    tg = _rup(max(tg, off_max, 128), 128)                 # lane-dense & covers max tap offset
    n_g = -(-G_out // tg)
    G_out_p = n_g * tg
    NB = n_g + 1                                          # +1 block so (j, j+1) always exist
    G_in_p = NB * tg
    xf = jnp.pad(xf, ((0, 0), (0, 0), (0, 0), (0, G_in_p - Dq * Hq * Wq)))
    # TODO(synk): the Cin<->NB swap is still one input-sized copy; a halo-block layout
    # could fold it into the phase transpose but complicates the un-flatten.
    x_ph = xf.reshape(N, P, Cin, NB, tg).transpose(0, 1, 3, 2, 4)   # (N, P, NB, Cin, tg)

    # per-tap (phase, flattened offset) plan + tap-major packed bf16 weights
    taps_by_phase = {}
    for kd in range(kD):
        for kh in range(kH):
            for kw in range(kW):
                ph = (((kd * dD) % sD) * sH + (kh * dH) % sH) * sW + (kw * dW) % sW
                off = (((kd * dD) // sD) * Hq + (kh * dH) // sH) * Wq + (kw * dW) // sW
                t = (kd * kH + kh) * kW + kw
                taps_by_phase.setdefault(ph, []).append((t, off))
    tap_plan = tuple((ph, tuple(v)) for ph, v in sorted(taps_by_phase.items()))

    K = K3 * Cin
    Kp = _rup(K, 16)                                      # bf16 sublane-tile aligned K
    w_packed = jnp.transpose(weight, (0, 2, 3, 4, 1)).reshape(Cout, K)
    w_packed = jnp.pad(w_packed, ((0, 0), (0, Kp - K))).astype(jnp.bfloat16)
    # NOTE: `bias` intentionally unused -- BatchNorm over batch stats with beta=0 cancels it.

    # validity mask over the over-computed flattened output positions (for BN stats)
    g = jnp.arange(G_out_p, dtype=jnp.int32)
    rem = g % (Hq * Wq)
    valid = ((g // (Hq * Wq)) < Do) & ((rem // Wq) < Ho) & ((rem % Wq) < Wo)
    mask = valid.astype(jnp.float32)[None, :]             # (1, G_out_p)

    # ---- Pallas kernel 1: one wide-K GEMM per (n, j) block + BN partial stats --------
    blk_x = P * Cin * tg * 2
    need1 = 2 * (2 * blk_x + Cout * tg * 4 + tg * 4 + Cout * 2 * 4 + Cout * Kp * 2) \
        + Kp * tg * 2
    flops1 = 2 * N * n_g * tg * Cout * Kp
    bytes1 = 2 * x_ph.size * 2 + w_packed.size * 2 + mask.size * 4 \
        + N * Cout * G_out_p * 4 + N * Cout * 2 * 4

    conv_out, stats = pl.pallas_call(
        functools.partial(_conv_wide_k_kernel, tap_plan=tap_plan, tg=tg,
                          cin=Cin, k_used=K),
        out_shape=(jax.ShapeDtypeStruct((N, Cout, G_out_p), jnp.float32),
                   jax.ShapeDtypeStruct((N, Cout, 2), jnp.float32)),
        grid_spec=pltpu.PrefetchScalarGridSpec(
            num_scalar_prefetch=0,
            grid=(N, n_g),
            in_specs=[
                pl.BlockSpec((1, P, 1, Cin, tg), lambda n, j: (n, 0, j, 0, 0)),
                pl.BlockSpec((1, P, 1, Cin, tg), lambda n, j: (n, 0, j + 1, 0, 0)),
                pl.BlockSpec((Cout, Kp), lambda n, j: (0, 0)),
                pl.BlockSpec((1, tg), lambda n, j: (0, j)),
            ],
            out_specs=[
                pl.BlockSpec((1, Cout, tg), lambda n, j: (n, 0, j)),
                pl.BlockSpec((1, Cout, 2), lambda n, j: (n, 0, 0)),
            ],
            scratch_shapes=[pltpu.VMEM((Kp, tg), jnp.bfloat16)],
        ),
        compiler_params=pltpu.CompilerParams(
            # j carries the per-sample BN-stats accumulator -> "arbitrary"; n is
            # independent -> "parallel" (megacore / v7x dual-TC sharding over samples).
            dimension_semantics=("parallel", "arbitrary"),
            vmem_limit_bytes=_vmem_limit(need1)),
        cost_estimate=pl.CostEstimate(flops=flops1, transcendentals=0,
                                      bytes_accessed=bytes1),
    )(x_ph, x_ph, w_packed, mask)

    # batch statistics (training-mode BatchNorm3d, biased variance) from partial sums
    count = float(N * Do * Ho * Wo)
    ssum = jnp.sum(stats, axis=0)                         # (Cout, 2)
    mean = ssum[:, 0] / count
    # TODO(synk): E[x^2]-E[x]^2 cancels badly for large-mean channels; fine here since
    # the conv bias is dropped and conv outputs are ~zero-mean.
    var = jnp.maximum(ssum[:, 1] / count - mean * mean, 0.0)
    inv = jax.lax.rsqrt(var + eps)

    # ---- Pallas kernel 2: normalize + ReLU with large lane-dense blocks, written
    # ---- directly in the final (N, Cout, G) layout (no epilogue transpose). ----------
    c_mult = 1
    for m in range(n_g, 0, -1):                           # target ~2 MiB output blocks
        if n_g % m == 0 and Cout * m * tg * 4 <= 2 * 2 ** 20:
            c_mult = m
            break
    chunk = c_mult * tg
    n_c = n_g // c_mult
    need2 = 2 * (2 * Cout * chunk * 4 + 2 * Cout * 4)
    bytes2 = 2 * N * Cout * G_out_p * 4 + 2 * Cout * 4

    y = pl.pallas_call(
        _bn_relu_kernel,
        out_shape=jax.ShapeDtypeStruct((N, Cout, G_out_p), jnp.float32),
        grid_spec=pltpu.PrefetchScalarGridSpec(
            num_scalar_prefetch=0,
            grid=(N, n_c),
            in_specs=[
                pl.BlockSpec((1, Cout, chunk), lambda n, c: (n, 0, c)),
                pl.BlockSpec((Cout, 1), lambda n, c: (0, 0)),
                pl.BlockSpec((Cout, 1), lambda n, c: (0, 0)),
            ],
            out_specs=pl.BlockSpec((1, Cout, chunk), lambda n, c: (n, 0, c)),
        ),
        compiler_params=pltpu.CompilerParams(
            dimension_semantics=("parallel", "parallel"),
            vmem_limit_bytes=_vmem_limit(need2)),
        cost_estimate=pl.CostEstimate(flops=3 * N * Cout * G_out_p, transcendentals=0,
                                      bytes_accessed=bytes2),
    )(conv_out, mean[:, None], inv[:, None])

    # un-flatten: drop over-computed (h'>=Ho, w'>=Wo, padded) positions -> NCDHW
    y = y[:, :, :Do * Hq * Wq].reshape(N, Cout, Do, Hq, Wq)[:, :, :, :Ho, :Wo]
    return y


def _reference(x, weight, bias, stride, padding, dilation, eps):
    """Independent JAX reference: Conv3d + BatchNorm3d(train, gamma=1, beta=0) + ReLU."""
    s, p, d = _t3(stride), _t3(padding), _t3(dilation)
    y = jax.lax.conv_general_dilated(
        x.astype(jnp.float32), weight.astype(jnp.float32),
        window_strides=s, padding=[(p[0], p[0]), (p[1], p[1]), (p[2], p[2])],
        rhs_dilation=d, dimension_numbers=("NCDHW", "OIDHW", "NCDHW"),
        precision=jax.lax.Precision.HIGHEST)
    y = y + bias[None, :, None, None, None]
    mean = y.mean(axis=(0, 2, 3, 4), keepdims=True)
    var = ((y - mean) ** 2).mean(axis=(0, 2, 3, 4), keepdims=True)
    return jnp.maximum((y - mean) * jax.lax.rsqrt(var + eps), 0.0)


if __name__ == "__main__":
    key = jax.random.PRNGKey(0)
    kx, kw, kb = jax.random.split(key, 3)
    eps = 1e-5
    N, Cin, Cout, S, k = 2, 4, 8, 16, 3

    x = jax.random.normal(kx, (N, Cin, S, S, S), jnp.float32)
    std = (Cin * k * k * k) ** -0.5
    weight = std * jax.random.normal(kw, (Cout, Cin, k, k, k), jnp.float32)
    # Non-zero bias on purpose: BatchNorm with batch stats / beta=0 cancels it exactly,
    # so the kernel (which skips the bias add) must still match the reference.
    bias = 0.1 * jax.random.normal(kb, (Cout,), jnp.float32)

    for stride, padding, out_sp in ((1, 1, 16), (2, 1, 8)):
        out = conv3d_bn_relu(x, weight, bias, stride=stride, padding=padding,
                             dilation=1, eps=eps)
        out = jax.block_until_ready(out)
        ref = _reference(x, weight, bias, stride, padding, 1, eps)
        assert out.shape == ref.shape == (N, Cout, out_sp, out_sp, out_sp), out.shape
        max_err = float(jnp.max(jnp.abs(out - ref)))
        assert jnp.allclose(out, ref, atol=2e-2, rtol=2e-2), (stride, max_err)

    print("KERNEL_OK")
</pallas_src>

<mosaic_0001>
module attributes {stable_mosaic.version = 11 : i64} {
  func.func @_conv_wide_k_kernel(%arg0: i32, %arg1: i32, %arg2: memref<1x1x1x4x1024xbf16, #tpu.memory_space<vmem>>, %arg3: memref<1x1x1x4x1024xbf16, #tpu.memory_space<vmem>>, %arg4: memref<8x112xbf16, #tpu.memory_space<vmem>>, %arg5: memref<1x1024xf32, #tpu.memory_space<vmem>>, %arg6: memref<1x8x1024xf32, #tpu.memory_space<vmem>>, %arg7: memref<1x8x2xf32, #tpu.memory_space<vmem>>, %arg8: memref<112x1024xbf16, #tpu.memory_space<vmem>>) attributes {dimension_semantics = [#tpu.dimension_semantics<parallel>, #tpu.dimension_semantics<arbitrary>], iteration_bounds = array<i64: 2, 6>, scalar_prefetch = 0 : i64, scratch_operands = 1 : i64, tpu.core_type = #tpu.core_type<tc>, window_params = [{transform_indices = @transform_0, window_bounds = array<i64: 1, 1, 1, 4, 1024>}, {transform_indices = @transform_1, window_bounds = array<i64: 1, 1, 1, 4, 1024>}, {pipeline_mode = #tpu.pipeline_mode<synchronous>, transform_indices = @transform_2, window_bounds = array<i64: 8, 112>}, {transform_indices = @transform_3, window_bounds = array<i64: 1, 1024>}, {transform_indices = @transform_4, window_bounds = array<i64: 1, 8, 1024>}, {transform_indices = @transform_5, window_bounds = array<i64: 1, 8, 2>}]} {
    %c0 = arith.constant 0 : index
    %c0_0 = arith.constant 0 : index
    %c0_1 = arith.constant 0 : index
    %c0_2 = arith.constant 0 : index
    %c0_3 = arith.constant 0 : index
    %0 = vector.load %arg2[%c0, %c0_0, %c0_1, %c0_2, %c0_3] : memref<1x1x1x4x1024xbf16, #tpu.memory_space<vmem>>, vector<1x1x1x4x1024xbf16>
    %1 = vector.shape_cast %0 : vector<1x1x1x4x1024xbf16> to vector<4x1024xbf16>
    %c0_4 = arith.constant 0 : index
    %c0_5 = arith.constant 0 : index
    %c0_6 = arith.constant 0 : index
    %c0_7 = arith.constant 0 : index
    %c0_8 = arith.constant 0 : index
    %2 = vector.load %arg3[%c0_4, %c0_5, %c0_6, %c0_7, %c0_8] : memref<1x1x1x4x1024xbf16, #tpu.memory_space<vmem>>, vector<1x1x1x4x1024xbf16>
    %3 = vector.shape_cast %2 : vector<1x1x1x4x1024xbf16> to vector<4x1024xbf16>
    %4 = tpu.concatenate %1, %3 in 1 : vector<4x1024xbf16>, vector<4x1024xbf16> -> vector<4x2048xbf16>
    %5 = vector.extract_strided_slice %4 {offsets = [0, 0], sizes = [4, 1024], strides = [1, 1]} : vector<4x2048xbf16> to vector<4x1024xbf16>
    %c0_9 = arith.constant 0 : index
    %c0_10 = arith.constant 0 : index
    %6 = vector.load %arg8[%c0_9, %c0_10] : memref<112x1024xbf16, #tpu.memory_space<vmem>>, vector<4x1024xbf16>
    tpu.vector_store %arg8[%c0_9, %c0_10], %5 {strides = array<i32>} : memref<112x1024xbf16, #tpu.memory_space<vmem>>, vector<4x1024xbf16>,
    %7 = vector.extract_strided_slice %4 {offsets = [0, 1], sizes = [4, 1024], strides = [1, 1]} : vector<4x2048xbf16> to vector<4x1024xbf16>
    %c4 = arith.constant 4 : index
    %c0_11 = arith.constant 0 : index
    %8 = vector.load %arg8[%c4, %c0_11] : memref<112x1024xbf16, #tpu.memory_space<vmem>>, vector<4x1024xbf16>
    tpu.vector_store %arg8[%c4, %c0_11], %7 {strides = array<i32>} : memref<112x1024xbf16, #tpu.memory_space<vmem>>, vector<4x1024xbf16>,
    %9 = vector.extract_strided_slice %4 {offsets = [0, 2], sizes = [4, 1024], strides = [1, 1]} : vector<4x2048xbf16> to vector<4x1024xbf16>
    %c8 = arith.constant 8 : index
    %c0_12 = arith.constant 0 : index
    %10 = vector.load %arg8[%c8, %c0_12] : memref<112x1024xbf16, #tpu.memory_space<vmem>>, vector<4x1024xbf16>
    tpu.vector_store %arg8[%c8, %c0_12], %9 {strides = array<i32>} : memref<112x1024xbf16, #tpu.memory_space<vmem>>, vector<4x1024xbf16>,
    %11 = vector.extract_strided_slice %4 {offsets = [0, 18], sizes = [4, 1024], strides = [1, 1]} : vector<4x2048xbf16> to vector<4x1024xbf16>
    %c12 = arith.constant 12 : index
    %c0_13 = arith.constant 0 : index
    %12 = vector.load %arg8[%c12, %c0_13] : memref<112x1024xbf16, #tpu.memory_space<vmem>>, vector<4x1024xbf16>
    tpu.vector_store %arg8[%c12, %c0_13], %11 {strides = array<i32>} : memref<112x1024xbf16, #tpu.memory_space<vmem>>, vector<4x1024xbf16>,
    %13 = vector.extract_strided_slice %4 {offsets = [0, 19], sizes = [4, 1024], strides = [1, 1]} : vector<4x2048xbf16> to vector<4x1024xbf16>
    %c16 = arith.constant 16 : index
    %c0_14 = arith.constant 0 : index
    %14 = vector.load %arg8[%c16, %c0_14] : memref<112x1024xbf16, #tpu.memory_space<vmem>>, vector<4x1024xbf16>
    tpu.vector_store %arg8[%c16, %c0_14], %13 {strides = array<i32>} : memref<112x1024xbf16, #tpu.memory_space<vmem>>, vector<4x1024xbf16>,
    %15 = vector.extract_strided_slice %4 {offsets = [0, 20], sizes = [4, 1024], strides = [1, 1]} : vector<4x2048xbf16> to vector<4x1024xbf16>
    %c20 = arith.constant 20 : index
    %c0_15 = arith.constant 0 : index
    %16 = vector.load %arg8[%c20, %c0_15] : memref<112x1024xbf16, #tpu.memory_space<vmem>>, vector<4x1024xbf16>
    tpu.vector_store %arg8[%c20, %c0_15], %15 {strides = array<i32>} : memref<112x1024xbf16, #tpu.memory_space<vmem>>, vector<4x1024xbf16>,
    %17 = vector.extract_strided_slice %4 {offsets = [0, 36], sizes = [4, 1024], strides = [1, 1]} : vector<4x2048xbf16> to vector<4x1024xbf16>
    %c24 = arith.constant 24 : index
    %c0_16 = arith.constant 0 : index
    %18 = vector.load %arg8[%c24, %c0_16] : memref<112x1024xbf16, #tpu.memory_space<vmem>>, vector<4x1024xbf16>
    tpu.vector_store %arg8[%c24, %c0_16], %17 {strides = array<i32>} : memref<112x1024xbf16, #tpu.memory_space<vmem>>, vector<4x1024xbf16>,
    %19 = vector.extract_strided_slice %4 {offsets = [0, 37], sizes = [4, 1024], strides = [1, 1]} : vector<4x2048xbf16> to vector<4x1024xbf16>
    %c28 = arith.constant 28 : index
    %c0_17 = arith.constant 0 : index
    %20 = vector.load %arg8[%c28, %c0_17] : memref<112x1024xbf16, #tpu.memory_space<vmem>>, vector<4x1024xbf16>
    tpu.vector_store %arg8[%c28, %c0_17], %19 {strides = array<i32>} : memref<112x1024xbf16, #tpu.memory_space<vmem>>, vector<4x1024xbf16>,
    %21 = vector.extract_strided_slice %4 {offsets = [0, 38], sizes = [4, 1024], strides = [1, 1]} : vector<4x2048xbf16> to vector<4x1024xbf16>
    %c32 = arith.constant 32 : index
    %c0_18 = arith.constant 0 : index
    %22 = vector.load %arg8[%c32, %c0_18] : memref<112x1024xbf16, #tpu.memory_space<vmem>>, vector<4x1024xbf16>
    tpu.vector_store %arg8[%c32, %c0_18], %21 {strides = array<i32>} : memref<112x1024xbf16, #tpu.memory_space<vmem>>, vector<4x1024xbf16>,
    %23 = vector.extract_strided_slice %4 {offsets = [0, 324], sizes = [4, 1024], strides = [1, 1]} : vector<4x2048xbf16> to vector<4x1024xbf16>
    %c36 = arith.constant 36 : index
    %c0_19 = arith.constant 0 : index
    %24 = vector.load %arg8[%c36, %c0_19] : memref<112x1024xbf16, #tpu.memory_space<vmem>>, vector<4x1024xbf16>
    tpu.vector_store %arg8[%c36, %c0_19], %23 {strides = array<i32>} : memref<112x1024xbf16, #tpu.memory_space<vmem>>, vector<4x1024xbf16>,
    %25 = vector.extract_strided_slice %4 {offsets = [0, 325], sizes = [4, 1024], strides = [1, 1]} : vector<4x2048xbf16> to vector<4x1024xbf16>
    %c40 = arith.constant 40 : index
    %c0_20 = arith.constant 0 : index
    %26 = vector.load %arg8[%c40, %c0_20] : memref<112x1024xbf16, #tpu.memory_space<vmem>>, vector<4x1024xbf16>
    tpu.vector_store %arg8[%c40, %c0_20], %25 {strides = array<i32>} : memref<112x1024xbf16, #tpu.memory_space<vmem>>, vector<4x1024xbf16>,
    %27 = vector.extract_strided_slice %4 {offsets = [0, 326], sizes = [4, 1024], strides = [1, 1]} : vector<4x2048xbf16> to vector<4x1024xbf16>
    %c44 = arith.constant 44 : index
    %c0_21 = arith.constant 0 : index
    %28 = vector.load %arg8[%c44, %c0_21] : memref<112x1024xbf16, #tpu.memory_space<vmem>>, vector<4x1024xbf16>
    tpu.vector_store %arg8[%c44, %c0_21], %27 {strides = array<i32>} : memref<112x1024xbf16, #tpu.memory_space<vmem>>, vector<4x1024xbf16>,
    %29 = vector.extract_strided_slice %4 {offsets = [0, 342], sizes = [4, 1024], strides = [1, 1]} : vector<4x2048xbf16> to vector<4x1024xbf16>
    %c48 = arith.constant 48 : index
    %c0_22 = arith.constant 0 : index
    %30 = vector.load %arg8[%c48, %c0_22] : memref<112x1024xbf16, #tpu.memory_space<vmem>>, vector<4x1024xbf16>
    tpu.vector_store %arg8[%c48, %c0_22], %29 {strides = array<i32>} : memref<112x1024xbf16, #tpu.memory_space<vmem>>, vector<4x1024xbf16>,
    %31 = vector.extract_strided_slice %4 {offsets = [0, 343], sizes = [4, 1024], strides = [1, 1]} : vector<4x2048xbf16> to vector<4x1024xbf16>
    %c52 = arith.constant 52 : index
    %c0_23 = arith.constant 0 : index
    %32 = vector.load %arg8[%c52, %c0_23] : memref<112x1024xbf16, #tpu.memory_space<vmem>>, vector<4x1024xbf16>
    tpu.vector_store %arg8[%c52, %c0_23], %31 {strides = array<i32>} : memref<112x1024xbf16, #tpu.memory_space<vmem>>, vector<4x1024xbf16>,
    %33 = vector.extract_strided_slice %4 {offsets = [0, 344], sizes = [4, 1024], strides = [1, 1]} : vector<4x2048xbf16> to vector<4x1024xbf16>
    %c56 = arith.constant 56 : index
    %c0_24 = arith.constant 0 : index
    %34 = vector.load %arg8[%c56, %c0_24] : memref<112x1024xbf16, #tpu.memory_space<vmem>>, vector<4x1024xbf16>
    tpu.vector_store %arg8[%c56, %c0_24], %33 {strides = array<i32>} : memref<112x1024xbf16, #tpu.memory_space<vmem>>, vector<4x1024xbf16>,
    %35 = vector.extract_strided_slice %4 {offsets = [0, 360], sizes = [4, 1024], strides = [1, 1]} : vector<4x2048xbf16> to vector<4x1024xbf16>
    %c60 = arith.constant 60 : index
    %c0_25 = arith.constant 0 : index
    %36 = vector.load %arg8[%c60, %c0_25] : memref<112x1024xbf16, #tpu.memory_space<vmem>>, vector<4x1024xbf16>
    tpu.vector_store %arg8[%c60, %c0_25], %35 {strides = array<i32>} : memref<112x1024xbf16, #tpu.memory_space<vmem>>, vector<4x1024xbf16>,
    %37 = vector.extract_strided_slice %4 {offsets = [0, 361], sizes = [4, 1024], strides = [1, 1]} : vector<4x2048xbf16> to vector<4x1024xbf16>
    %c64 = arith.constant 64 : index
    %c0_26 = arith.constant 0 : index
    %38 = vector.load %arg8[%c64, %c0_26] : memref<112x1024xbf16, #tpu.memory_space<vmem>>, vector<4x1024xbf16>
    tpu.vector_store %arg8[%c64, %c0_26], %37 {strides = array<i32>} : memref<112x1024xbf16, #tpu.memory_space<vmem>>, vector<4x1024xbf16>,
    %39 = vector.extract_strided_slice %4 {offsets = [0, 362], sizes = [4, 1024], strides = [1, 1]} : vector<4x2048xbf16> to vector<4x1024xbf16>
    %c68 = arith.constant 68 : index
    %c0_27 = arith.constant 0 : index
    %40 = vector.load %arg8[%c68, %c0_27] : memref<112x1024xbf16, #tpu.memory_space<vmem>>, vector<4x1024xbf16>
    tpu.vector_store %arg8[%c68, %c0_27], %39 {strides = array<i32>} : memref<112x1024xbf16, #tpu.memory_space<vmem>>, vector<4x1024xbf16>,
    %41 = vector.extract_strided_slice %4 {offsets = [0, 648], sizes = [4, 1024], strides = [1, 1]} : vector<4x2048xbf16> to vector<4x1024xbf16>
    %c72 = arith.constant 72 : index
    %c0_28 = arith.constant 0 : index
    %42 = vector.load %arg8[%c72, %c0_28] : memref<112x1024xbf16, #tpu.memory_space<vmem>>, vector<4x1024xbf16>
    tpu.vector_store %arg8[%c72, %c0_28], %41 {strides = array<i32>} : memref<112x1024xbf16, #tpu.memory_space<vmem>>, vector<4x1024xbf16>,
    %43 = vector.extract_strided_slice %4 {offsets = [0, 649], sizes = [4, 1024], strides = [1, 1]} : vector<4x2048xbf16> to vector<4x1024xbf16>
    %c76 = arith.constant 76 : index
    %c0_29 = arith.constant 0 : index
    %44 = vector.load %arg8[%c76, %c0_29] : memref<112x1024xbf16, #tpu.memory_space<vmem>>, vector<4x1024xbf16>
    tpu.vector_store %arg8[%c76, %c0_29], %43 {strides = array<i32>} : memref<112x1024xbf16, #tpu.memory_space<vmem>>, vector<4x1024xbf16>,
    %45 = vector.extract_strided_slice %4 {offsets = [0, 650], sizes = [4, 1024], strides = [1, 1]} : vector<4x2048xbf16> to vector<4x1024xbf16>
    %c80 = arith.constant 80 : index
    %c0_30 = arith.constant 0 : index
    %46 = vector.load %arg8[%c80, %c0_30] : memref<112x1024xbf16, #tpu.memory_space<vmem>>, vector<4x1024xbf16>
    tpu.vector_store %arg8[%c80, %c0_30], %45 {strides = array<i32>} : memref<112x1024xbf16, #tpu.memory_space<vmem>>, vector<4x1024xbf16>,
    %47 = vector.extract_strided_slice %4 {offsets = [0, 666], sizes = [4, 1024], strides = [1, 1]} : vector<4x2048xbf16> to vector<4x1024xbf16>
    %c84 = arith.constant 84 : index
    %c0_31 = arith.constant 0 : index
    %48 = vector.load %arg8[%c84, %c0_31] : memref<112x1024xbf16, #tpu.memory_space<vmem>>, vector<4x1024xbf16>
    tpu.vector_store %arg8[%c84, %c0_31], %47 {strides = array<i32>} : memref<112x1024xbf16, #tpu.memory_space<vmem>>, vector<4x1024xbf16>,
    %49 = vector.extract_strided_slice %4 {offsets = [0, 667], sizes = [4, 1024], strides = [1, 1]} : vector<4x2048xbf16> to vector<4x1024xbf16>
    %c88 = arith.constant 88 : index
    %c0_32 = arith.constant 0 : index
    %50 = vector.load %arg8[%c88, %c0_32] : memref<112x1024xbf16, #tpu.memory_space<vmem>>, vector<4x1024xbf16>
    tpu.vector_store %arg8[%c88, %c0_32], %49 {strides = array<i32>} : memref<112x1024xbf16, #tpu.memory_space<vmem>>, vector<4x1024xbf16>,
    %51 = vector.extract_strided_slice %4 {offsets = [0, 668], sizes = [4, 1024], strides = [1, 1]} : vector<4x2048xbf16> to vector<4x1024xbf16>
    %c92 = arith.constant 92 : index
    %c0_33 = arith.constant 0 : index
    %52 = vector.load %arg8[%c92, %c0_33] : memref<112x1024xbf16, #tpu.memory_space<vmem>>, vector<4x1024xbf16>
    tpu.vector_store %arg8[%c92, %c0_33], %51 {strides = array<i32>} : memref<112x1024xbf16, #tpu.memory_space<vmem>>, vector<4x1024xbf16>,
    %53 = vector.extract_strided_slice %4 {offsets = [0, 684], sizes = [4, 1024], strides = [1, 1]} : vector<4x2048xbf16> to vector<4x1024xbf16>
    %c96 = arith.constant 96 : index
    %c0_34 = arith.constant 0 : index
    %54 = vector.load %arg8[%c96, %c0_34] : memref<112x1024xbf16, #tpu.memory_space<vmem>>, vector<4x1024xbf16>
    tpu.vector_store %arg8[%c96, %c0_34], %53 {strides = array<i32>} : memref<112x1024xbf16, #tpu.memory_space<vmem>>, vector<4x1024xbf16>,
    %55 = vector.extract_strided_slice %4 {offsets = [0, 685], sizes = [4, 1024], strides = [1, 1]} : vector<4x2048xbf16> to vector<4x1024xbf16>
    %c100 = arith.constant 100 : index
    %c0_35 = arith.constant 0 : index
    %56 = vector.load %arg8[%c100, %c0_35] : memref<112x1024xbf16, #tpu.memory_space<vmem>>, vector<4x1024xbf16>
    tpu.vector_store %arg8[%c100, %c0_35], %55 {strides = array<i32>} : memref<112x1024xbf16, #tpu.memory_space<vmem>>, vector<4x1024xbf16>,
    %57 = vector.extract_strided_slice %4 {offsets = [0, 686], sizes = [4, 1024], strides = [1, 1]} : vector<4x2048xbf16> to vector<4x1024xbf16>
    %c104 = arith.constant 104 : index
    %c0_36 = arith.constant 0 : index
    %58 = vector.load %arg8[%c104, %c0_36] : memref<112x1024xbf16, #tpu.memory_space<vmem>>, vector<4x1024xbf16>
    tpu.vector_store %arg8[%c104, %c0_36], %57 {strides = array<i32>} : memref<112x1024xbf16, #tpu.memory_space<vmem>>, vector<4x1024xbf16>,
    %cst = arith.constant 0.000000e+00 : bf16
    %59 = vector.broadcast %cst : bf16 to vector<4x1024xbf16>
    %c108 = arith.constant 108 : index
    %c0_37 = arith.constant 0 : index
    %60 = vector.load %arg8[%c108, %c0_37] : memref<112x1024xbf16, #tpu.memory_space<vmem>>, vector<4x1024xbf16>
    tpu.vector_store %arg8[%c108, %c0_37], %59 {strides = array<i32>} : memref<112x1024xbf16, #tpu.memory_space<vmem>>, vector<4x1024xbf16>,
    %c0_38 = arith.constant 0 : index
    %c0_39 = arith.constant 0 : index
    %61 = vector.load %arg4[%c0_38, %c0_39] : memref<8x112xbf16, #tpu.memory_space<vmem>>, vector<8x112xbf16>
    %c0_40 = arith.constant 0 : index
    %c0_41 = arith.constant 0 : index
    %62 = vector.load %arg8[%c0_40, %c0_41] : memref<112x1024xbf16, #tpu.memory_space<vmem>>, vector<112x1024xbf16>
    %cst_42 = arith.constant dense<0.000000e+00> : vector<8x1024xf32>
    %63 = tpu.matmul %61, %62, %cst_42 {dimension_numbers = #tpu.dot_dimension_numbers<[1], [0], [0], [1], [0, 0, 1, 1], [], []>} : vector<8x112xbf16>, vector<112x1024xbf16>, vector<8x1024xf32> -> vector<8x1024xf32>
    %c0_43 = arith.constant 0 : index
    %c0_44 = arith.constant 0 : index
    %c0_45 = arith.constant 0 : index
    %64 = vector.load %arg6[%c0_43, %c0_44, %c0_45] : memref<1x8x1024xf32, #tpu.memory_space<vmem>>, vector<1x8x1024xf32>
    %65 = vector.shape_cast %64 : vector<1x8x1024xf32> to vector<8x1024xf32>
    %66 = vector.shape_cast %63 : vector<8x1024xf32> to vector<1x8x1024xf32>
    tpu.vector_store %arg6[%c0_43, %c0_44, %c0_45], %66 {strides = array<i32>} : memref<1x8x1024xf32, #tpu.memory_space<vmem>>, vector<1x8x1024xf32>,
    %c0_46 = arith.constant 0 : index
    %c0_47 = arith.constant 0 : index
    %67 = vector.load %arg5[%c0_46, %c0_47] : memref<1x1024xf32, #tpu.memory_space<vmem>>, vector<1x1024xf32>
    %68 = vector.broadcast %67 : vector<1x1024xf32> to vector<8x1024xf32>
    %69 = arith.mulf %63, %68 : vector<8x1024xf32>
    %cst_48 = arith.constant dense<0.000000e+00> : vector<8xf32>
    %70 = vector.multi_reduction <add>, %69, %cst_48 [1] : vector<8x1024xf32> to vector<8xf32>
    %71 = vector.shape_cast %70 : vector<8xf32> to vector<8x1xf32>
    %72 = arith.mulf %69, %63 : vector<8x1024xf32>
    %cst_49 = arith.constant dense<0.000000e+00> : vector<8xf32>
    %73 = vector.multi_reduction <add>, %72, %cst_49 [1] : vector<8x1024xf32> to vector<8xf32>
    %74 = vector.shape_cast %73 : vector<8xf32> to vector<8x1xf32>
    %c0_i32 = arith.constant 0 : i32
    %75 = arith.cmpi eq, %arg1, %c0_i32 : i32
    %76 = arith.extui %75 : i1 to i32
    %c0_i32_50 = arith.constant 0 : i32
    %77 = arith.cmpi ne, %76, %c0_i32_50 : i32
    scf.if %77 {
      %cst_57 = arith.constant 0.000000e+00 : f32
      %83 = vector.broadcast %cst_57 : f32 to vector<1x8x2xf32>
      %c0_58 = arith.constant 0 : index
      %c0_59 = arith.constant 0 : index
      %c0_60 = arith.constant 0 : index
      %84 = vector.load %arg7[%c0_58, %c0_59, %c0_60] : memref<1x8x2xf32, #tpu.memory_space<vmem>>, vector<1x8x2xf32>
      tpu.vector_store %arg7[%c0_58, %c0_59, %c0_60], %83 {strides = array<i32>} : memref<1x8x2xf32, #tpu.memory_space<vmem>>, vector<1x8x2xf32>,
    } else {
    }
    %c0_51 = arith.constant 0 : index
    %c0_52 = arith.constant 0 : index
    %c0_53 = arith.constant 0 : index
    %78 = vector.load %arg7[%c0_51, %c0_52, %c0_53] : memref<1x8x2xf32, #tpu.memory_space<vmem>>, vector<1x8x2xf32>
    %79 = tpu.concatenate %71, %74 in 1 : vector<8x1xf32>, vector<8x1xf32> -> vector<8x2xf32>
    %80 = vector.shape_cast %79 : vector<8x2xf32> to vector<1x8x2xf32>
    %81 = arith.addf %78, %80 : vector<1x8x2xf32>
    %c0_54 = arith.constant 0 : index
    %c0_55 = arith.constant 0 : index
    %c0_56 = arith.constant 0 : index
    %82 = vector.load %arg7[%c0_54, %c0_55, %c0_56] : memref<1x8x2xf32, #tpu.memory_space<vmem>>, vector<1x8x2xf32>
    tpu.vector_store %arg7[%c0_54, %c0_55, %c0_56], %81 {strides = array<i32>} : memref<1x8x2xf32, #tpu.memory_space<vmem>>, vector<1x8x2xf32>,
    return
  }
  func.func @transform_0(%arg0: i32, %arg1: i32) -> (i32, i32, i32, i32, i32) {
    %c0_i32 = arith.constant 0 : i32
    %c0_i32_0 = arith.constant 0 : i32
    %c0_i32_1 = arith.constant 0 : i32
    %c0_i32_2 = arith.constant 0 : i32
    return %arg0, %c0_i32, %arg1, %c0_i32_0, %c0_i32_1 : i32, i32, i32, i32, i32
  }
  func.func @transform_1(%arg0: i32, %arg1: i32) -> (i32, i32, i32, i32, i32) {
    %c1_i32 = arith.constant 1 : i32
    %0 = arith.addi %arg1, %c1_i32 : i32
    %c0_i32 = arith.constant 0 : i32
    %c0_i32_0 = arith.constant 0 : i32
    %c0_i32_1 = arith.constant 0 : i32
    %c0_i32_2 = arith.constant 0 : i32
    return %arg0, %c0_i32, %0, %c0_i32_0, %c0_i32_1 : i32, i32, i32, i32, i32
  }
  func.func @transform_2(%arg0: i32, %arg1: i32) -> (i32, i32) {
    %c0_i32 = arith.constant 0 : i32
    %c0_i32_0 = arith.constant 0 : i32
    %c0_i32_1 = arith.constant 0 : i32
    return %c0_i32, %c0_i32_0 : i32, i32
  }
  func.func @transform_3(%arg0: i32, %arg1: i32) -> (i32, i32) {
    %c0_i32 = arith.constant 0 : i32
    %c0_i32_0 = arith.constant 0 : i32
    return %c0_i32, %arg1 : i32, i32
  }
  func.func @transform_4(%arg0: i32, %arg1: i32) -> (i32, i32, i32) {
    %c0_i32 = arith.constant 0 : i32
    %c0_i32_0 = arith.constant 0 : i32
    return %arg0, %c0_i32, %arg1 : i32, i32, i32
  }
  func.func @transform_5(%arg0: i32, %arg1: i32) -> (i32, i32, i32) {
    %c0_i32 = arith.constant 0 : i32
    %c0_i32_0 = arith.constant 0 : i32
    %c0_i32_1 = arith.constant 0 : i32
    return %arg0, %c0_i32, %c0_i32_0 : i32, i32, i32
  }
}

</mosaic_0001>

<llo_original>
// kernel: tpu_custom_call.1
$region0: #{tpu_custom_call.1}
  #allocation0 [shape = 'u32[]', space=smem, size = 0x4, offset = 0x4, fixed_abs, tag = 'smem constant byte address 0x4 - core index']
  #allocation1 [shape = 'u32[144,128]{1,0:T(1,128)}', space=vmem, size = 0x12000, scoped, tag = 'internal scratch']
  #allocation2 [shape = 'bf16[112,1024]{1,0:T(16,128)(2,1)}', space=vmem, size = 0x38000, scoped, tag = 'scratch operand']
  %s0 = inlined_call_operand.hbm [shape: bf16[2,1,7,4,1024], index: 0, kind: input, shape index: {}]
  %s1 = inlined_call_operand.hbm [shape: bf16[2,1,7,4,1024], index: 1, kind: input, shape index: {}]
  %s2 = inlined_call_operand.vmem [shape: bf16[8,112], index: 2, kind: input, shape index: {}]
  %s3 = inlined_call_operand.hbm [shape: f32[1,6144], index: 3, kind: input, shape index: {}]
  %s4 = inlined_call_operand.hbm [shape: f32[2,8,6144], index: 4, kind: output, shape index: {0}]
  %s5 = inlined_call_operand.vmem [shape: f32[2,8,2], index: 5, kind: output, shape index: {1}]
  %6 = xla_tuple %s4, %s5
  %s7 = sld [smem:[#allocation0]]
  $region73: #{tpu_custom_call.1} parent=0
    _
  %s9 = ssub.s32 1, %s7
  %s10 = scalar_select 0, %s9, %s7
  $region1: #{tpu_custom_call.1} parent=0
    #allocation3 [shape = 'u8[16384]{0}', space=vmem, size = 0x4000, scoped, tag = 'input window, operand 0']
    #allocation4 [shape = 's32[2]{0}', space=sflag, size = 0x8, scoped, tag = 'scoped memory for tpu_custom_call.1']
    #allocation5 [shape = 's32[2]{0}', space=sflag, size = 0x8, scoped, tag = 'scoped memory for tpu_custom_call.1']
    #allocation6 [shape = 'u8[16384]{0}', space=vmem, size = 0x4000, scoped, tag = 'input window, operand 1']
    #allocation7 [shape = 's32[2]{0}', space=sflag, size = 0x8, scoped, tag = 'scoped memory for tpu_custom_call.1']
    #allocation8 [shape = 'u8[8192]{0}', space=vmem, size = 0x2000, scoped, tag = 'input window, operand 3']
    #allocation9 [shape = 'u8[65536]{0}', space=vmem, size = 0x10000, scoped, tag = 'output window, operand 0']
    %11 = vsyncpa [#allocation4], 0
    %s12 = scalar_lea.sflag [#allocation4], 1
    %13 = vsyncpa %s12, 0
    %14 = vsyncpa [#allocation7], 0
    %s15 = scalar_lea.sflag [#allocation7], 1
    %16 = vsyncpa %s15, 0
    %17 = vsyncpa [#allocation5], 0
    %s18 = scalar_lea.sflag [#allocation5], 1
    %19 = vsyncpa %s18, 0
    loop: start=0, step=1, limit=14
    $region2: #{tpu_custom_call.1} parent=1 // loop_pre_header
      _
    $region3: #{tpu_custom_call.1} parent=1 // loop_header
      %s21 = sphi 0, %s25
      %p22 = scmp.ge.s32.totalorder %s21, 14
      %s28 = sphi 0, %s40
      %s29 = sphi 0, %s36
      %s30 = sphi 0, %s28
      %s31 = sphi 0, %s29
      %s32 = sphi 0, %s30
      %s33 = sphi 0, %s31
      %s45 = sphi 0, %s47
      %s48 = sphi 0, %s45
      %s49 = sphi 0, %s48
      %s65 = sphi 0, %s49
      %s75 = sphi 0, %s77
      %s78 = sphi 0, %s75
      %s79 = sphi 0, %s78
      %s95 = sphi 0, %s79
      %s99 = sphi 0, %s99
      %s101 = sphi 0, %s99
      %s102 = sphi 0, %s101
      %s116 = sphi 0, %s102
      %s122 = sphi 0, %s124
      %s125 = sphi 0, %s122
      %s126 = sphi 0, %s125
      %s142 = sphi 0, %s126
      %s150 = sphi 0, %s152
      %s153 = sphi 0, %s150
      %s154 = sphi 0, %s153
      %s170 = sphi 0, %s154
      %s176 = sphi 0, %s178
      %s179 = sphi 0, %s176
      %s180 = sphi 0, %s179
      %s196 = sphi 0, %s180
    $region4: #{tpu_custom_call.1} parent=1 // loop_header_branch
      %24 = sbr.rel (%p22) target = $region8
    $region5: #{tpu_custom_call.1} parent=1 // loop_body
      %s26 = ssub.s32 %s21, 1
      %s27 = ssub.s32 %s21, 2
      %s34 = sadd.s32 1, %s29
      %p35 = scmp.ge.s32.totalorder %s34, 6
      %s36 = scalar_select %p35, 0, %s34
      %s37 = sadd.s32 1, %s28
      %s38 = scalar_select %p35, %s37, %s28
      %p39 = scmp.ge.s32.totalorder %s38, 2
      %s40 = scalar_select %p39, 0, %s38
      %s41 = ssub.s32 %s28, %s40
      %s42 = ssub.s32 %s29, %s36
      %s43 = sor.u32 %s41, %s42
      %p44 = scmp.eq.s32.totalorder %s43, 0
      %s46 = sadd.s32 %s45, 1
      %s47 = scalar_select %p44, %s45, %s46
      %p50 = pneg %p44
      %p51 = scmp.eq.s32.totalorder %s21, 11
      %p52 = por %p50, %p51
      %p53 = scmp.ne.s32.totalorder %s45, %s48
      %p54 = scmp.eq.s32.totalorder %s21, 0
      %p55 = por %p53, %p54
      %p56 = scmp.ne.s32.totalorder %s45, %s48
      %p57 = scmp.eq.s32.totalorder %s26, 11
      %p58 = por %p56, %p57
      %p59 = scmp.ne.s32.totalorder %s48, %s49
      %p60 = scmp.eq.s32.totalorder %s26, 0
      %p61 = por %p59, %p60
      %p62 = scmp.ne.s32.totalorder %s48, %s49
      %p63 = scmp.eq.s32.totalorder %s27, 11
      %p64 = por %p62, %p63
      %p66 = scmp.ne.s32.totalorder %s49, %s65
      %p67 = scmp.eq.s32.totalorder %s27, 0
      %p68 = por %p66, %p67
      %s69 = sadd.s32 %s29, 1
      %s70 = sadd.s32 %s36, 1
      %s71 = ssub.s32 %s28, %s40
      %s72 = ssub.s32 %s69, %s70
      %s73 = sor.u32 %s71, %s72
      %p74 = scmp.eq.s32.totalorder %s73, 0
      %s76 = sadd.s32 %s75, 1
      %s77 = scalar_select %p74, %s75, %s76
      %p80 = pneg %p74
      %p81 = scmp.eq.s32.totalorder %s21, 11
      %p82 = por %p80, %p81
      %p83 = scmp.ne.s32.totalorder %s75, %s78
      %p84 = scmp.eq.s32.totalorder %s21, 0
      %p85 = por %p83, %p84
      %p86 = scmp.ne.s32.totalorder %s75, %s78
      %p87 = scmp.eq.s32.totalorder %s26, 11
      %p88 = por %p86, %p87
      %p89 = scmp.ne.s32.totalorder %s78, %s79
      %p90 = scmp.eq.s32.totalorder %s26, 0
      %p91 = por %p89, %p90
      %p92 = scmp.ne.s32.totalorder %s78, %s79
      %p93 = scmp.eq.s32.totalorder %s27, 11
      %p94 = por %p92, %p93
      %p96 = scmp.ne.s32.totalorder %s79, %s95
      %p97 = scmp.eq.s32.totalorder %s27, 0
      %p98 = por %p96, %p97
      %s100 = sadd.s32 %s99, 1
      %p103 = scmp.eq.s32.totalorder %s21, 11
      %p104 = scmp.ne.s32.totalorder %s99, %s101
      %p105 = scmp.eq.s32.totalorder %s21, 0
      %p106 = por %p104, %p105
      %p107 = scmp.ne.s32.totalorder %s99, %s101
      %p108 = scmp.eq.s32.totalorder %s26, 11
      %p109 = por %p107, %p108
      %p110 = scmp.ne.s32.totalorder %s101, %s102
      %p111 = scmp.eq.s32.totalorder %s26, 0
      %p112 = por %p110, %p111
      %p113 = scmp.ne.s32.totalorder %s101, %s102
      %p114 = scmp.eq.s32.totalorder %s27, 11
      %p115 = por %p113, %p114
      %p117 = scmp.ne.s32.totalorder %s102, %s116
      %p118 = scmp.eq.s32.totalorder %s27, 0
      %p119 = por %p117, %p118
      %s120 = ssub.s32 %s29, %s36
      %p121 = scmp.eq.s32.totalorder %s120, 0
      %s123 = sadd.s32 %s122, 1
      %s124 = scalar_select %p121, %s122, %s123
      %p127 = pneg %p121
      %p128 = scmp.eq.s32.totalorder %s21, 11
      %p129 = por %p127, %p128
      %p130 = scmp.ne.s32.totalorder %s122, %s125
      %p131 = scmp.eq.s32.totalorder %s21, 0
      %p132 = por %p130, %p131
      %p133 = scmp.ne.s32.totalorder %s122, %s125
      %p134 = scmp.eq.s32.totalorder %s26, 11
      %p135 = por %p133, %p134
      %p136 = scmp.ne.s32.totalorder %s125, %s126
      %p137 = scmp.eq.s32.totalorder %s26, 0
      %p138 = por %p136, %p137
      %p139 = scmp.ne.s32.totalorder %s125, %s126
      %p140 = scmp.eq.s32.totalorder %s27, 11
      %p141 = por %p139, %p140
      %p143 = scmp.ne.s32.totalorder %s126, %s142
      %p144 = scmp.eq.s32.totalorder %s27, 0
      %p145 = por %p143, %p144
      %s146 = ssub.s32 %s28, %s40
      %s147 = ssub.s32 %s29, %s36
      %s148 = sor.u32 %s146, %s147
      %p149 = scmp.eq.s32.totalorder %s148, 0
      %s151 = sadd.s32 %s150, 1
      %s152 = scalar_select %p149, %s150, %s151
      %p155 = pneg %p149
      %p156 = scmp.eq.s32.totalorder %s21, 11
      %p157 = por %p155, %p156
      %p158 = scmp.ne.s32.totalorder %s150, %s153
      %p159 = scmp.eq.s32.totalorder %s21, 0
      %p160 = por %p158, %p159
      %p161 = scmp.ne.s32.totalorder %s150, %s153
      %p162 = scmp.eq.s32.totalorder %s26, 11
      %p163 = por %p161, %p162
      %p164 = scmp.ne.s32.totalorder %s153, %s154
      %p165 = scmp.eq.s32.totalorder %s26, 0
      %p166 = por %p164, %p165
      %p167 = scmp.ne.s32.totalorder %s153, %s154
      %p168 = scmp.eq.s32.totalorder %s27, 11
      %p169 = por %p167, %p168
      %p171 = scmp.ne.s32.totalorder %s154, %s170
      %p172 = scmp.eq.s32.totalorder %s27, 0
      %p173 = por %p171, %p172
      %s174 = ssub.s32 %s28, %s40
      %p175 = scmp.eq.s32.totalorder %s174, 0
      %s177 = sadd.s32 %s176, 1
      %s178 = scalar_select %p175, %s176, %s177
      %p181 = pneg %p175
      %p182 = scmp.eq.s32.totalorder %s21, 11
      %p183 = por %p181, %p182
      %p184 = scmp.ne.s32.totalorder %s176, %s179
      %p185 = scmp.eq.s32.totalorder %s21, 0
      %p186 = por %p184, %p185
      %p187 = scmp.ne.s32.totalorder %s176, %s179
      %p188 = scmp.eq.s32.totalorder %s26, 11
      %p189 = por %p187, %p188
      %p190 = scmp.ne.s32.totalorder %s179, %s180
      %p191 = scmp.eq.s32.totalorder %s26, 0
      %p192 = por %p190, %p191
      %p193 = scmp.ne.s32.totalorder %s179, %s180
      %p194 = scmp.eq.s32.totalorder %s27, 11
      %p195 = por %p193, %p194
      %p197 = scmp.ne.s32.totalorder %s180, %s196
      %p198 = scmp.eq.s32.totalorder %s27, 0
      %p199 = por %p197, %p198
      %p200 = scmp.le.s32.totalorder 1, %s21
      %p201 = scmp.lt.s32.totalorder %s21, 13
      %p202 = pnand %p200, %p201
      %p203 = pneg %p202
      // Predicated region
      $region9: #{tpu_custom_call.1} parent=5 // pred_check
        _
      $region10: #{tpu_custom_call.1} parent=5 // pred_check_branch
        %205 = sbr.rel (%p202) target = $region12
      $region11: #{tpu_custom_call.1} parent=5 // pred_region
        %s206 = ssub.s32 %s21, 1
        // Predicated region
        $region13: #{tpu_custom_call.1} parent=11 // pred_check
          %p207 = pneg %p112
        $region14: #{tpu_custom_call.1} parent=11 // pred_check_branch
          %209 = sbr.rel (%p207) target = $region16
        $region15: #{tpu_custom_call.1} parent=11 // pred_region
          _
        $region16: #{tpu_custom_call.1} parent=11 // pred_fallthru
          _
      $region12: #{tpu_custom_call.1} parent=5 // pred_fallthru
        _
      %p210 = scmp.lt.s32.totalorder %s21, 12
      // Predicated region
      $region17: #{tpu_custom_call.1} parent=5 // pred_check
        %p211 = pneg %p210
      $region18: #{tpu_custom_call.1} parent=5 // pred_check_branch
        %213 = sbr.rel (%p211) target = $region20
      $region19: #{tpu_custom_call.1} parent=5 // pred_region
        // Predicated region
        $region21: #{tpu_custom_call.1} parent=19 // pred_check
          %p214 = pneg %p55
        $region22: #{tpu_custom_call.1} parent=19 // pred_check_branch
          %216 = sbr.rel (%p214) target = $region24
        $region23: #{tpu_custom_call.1} parent=19 // pred_region
          %s217 = sand.u32 %s45, 1
          %s218 = scalar_lea.sflag [#allocation4], %s217
          %s219 = sand.u32 %s45, 1
          %s220 = smul.addr %s219, 16
          %s221 = scalar_lea.vmem [#allocation3], %s220
          %s223 = ssub.s32 256, 256
          %224 = vsyncadd %s218, %s223
          %s225 = smul.addr %s29, 8
          %s226 = smul.addr %s28, 56
          %s227 = sadd.s32 %s225, %s226
          %s228 = smul.addr %s227, 32
          %s229 = scalar_lea.hbm %s0, %s228
          %s231 = sshll.u32 %s221, 4
          %s232 = int_to_ptr.vmem [resolvable:$true] %s231
          %234 = dma.hbm_to_vmem [thread:$0]  %s229, 256, %s232, %s218
        $region24: #{tpu_custom_call.1} parent=19 // pred_fallthru
          _
        // Predicated region
        $region25: #{tpu_custom_call.1} parent=19 // pred_check
          %p235 = pneg %p85
        $region26: #{tpu_custom_call.1} parent=19 // pred_check_branch
          %237 = sbr.rel (%p235) target = $region28
        $region27: #{tpu_custom_call.1} parent=19 // pred_region
          %s238 = sand.u32 %s21, 1
          %s239 = scalar_lea.sflag [#allocation7], %s238
          %s240 = sand.u32 %s75, 1
          %s241 = smul.addr %s240, 16
          %s242 = scalar_lea.vmem [#allocation6], %s241
          %s243 = sadd.s32 %s29, 1
          %s245 = ssub.s32 256, 256
          %246 = vsyncadd %s239, %s245
          %s247 = smul.addr %s243, 8
          %s248 = smul.addr %s28, 56
          %s249 = sadd.s32 %s247, %s248
          %s250 = smul.addr %s249, 32
          %s251 = scalar_lea.hbm %s1, %s250
          %s253 = sshll.u32 %s242, 4
          %s254 = int_to_ptr.vmem [resolvable:$true] %s253
          %256 = dma.hbm_to_vmem [thread:$0]  %s251, 256, %s254, %s239
        $region28: #{tpu_custom_call.1} parent=19 // pred_fallthru
          _
        // Predicated region
        $region29: #{tpu_custom_call.1} parent=19 // pred_check
          %p257 = pneg %p132
        $region30: #{tpu_custom_call.1} parent=19 // pred_check_branch
          %259 = sbr.rel (%p257) target = $region32
        $region31: #{tpu_custom_call.1} parent=19 // pred_region
          %s260 = sand.u32 %s21, 1
          %s261 = scalar_lea.sflag [#allocation7], %s260
          %s262 = sand.u32 %s122, 1
          %s263 = smul.addr %s262, 8
          %s264 = scalar_lea.vmem [#allocation8], %s263
          %s265 = smul.u32 8, %s29
          %s267 = ssub.s32 128, 128
          %268 = vsyncadd %s261, %s267
          %s269 = smul.addr %s265, 16
          %s270 = scalar_lea.hbm %s3, %s269
          %s272 = sshll.u32 %s264, 4
          %s273 = int_to_ptr.vmem [resolvable:$true] %s272
          %275 = dma.hbm_to_vmem [thread:$0]  %s270, 128, %s273, %s261
        $region32: #{tpu_custom_call.1} parent=19 // pred_fallthru
          _
      $region20: #{tpu_custom_call.1} parent=5 // pred_fallthru
        _
      %p276 = scmp.le.s32.totalorder 1, %s21
      %p277 = scmp.lt.s32.totalorder %s21, 13
      %p278 = pnand %p276, %p277
      %p279 = pneg %p278
      // Predicated region
      $region33: #{tpu_custom_call.1} parent=5 // pred_check
        _
      $region34: #{tpu_custom_call.1} parent=5 // pred_check_branch
        %281 = sbr.rel (%p278) target = $region36
      $region35: #{tpu_custom_call.1} parent=5 // pred_region
        %s282 = ssub.s32 %s21, 1
        %s283 = sand.u32 %s48, 1
        %s284 = scalar_lea.sflag [#allocation4], %s283
        %s285 = sand.u32 %s48, 1
        %s286 = smul.addr %s285, 16
        %s287 = scalar_lea.vmem [#allocation3], %s286
        // Predicated region
        $region37: #{tpu_custom_call.1} parent=35 // pred_check
          %p288 = pneg %p61
        $region38: #{tpu_custom_call.1} parent=35 // pred_check_branch
          %290 = sbr.rel (%p288) target = $region40
        $region39: #{tpu_custom_call.1} parent=35 // pred_region
          %291 = dma.done %s284, 256
        $region40: #{tpu_custom_call.1} parent=35 // pred_fallthru
          _
        %s292 = sand.u32 %s26, 1
        %s293 = scalar_lea.sflag [#allocation7], %s292
        %s294 = sand.u32 %s78, 1
        %s295 = smul.addr %s294, 16
        %s296 = scalar_lea.vmem [#allocation6], %s295
        // Predicated region
        $region41: #{tpu_custom_call.1} parent=35 // pred_check
          %p297 = pneg %p91
        $region42: #{tpu_custom_call.1} parent=35 // pred_check_branch
          %299 = sbr.rel (%p297) target = $region44
        $region43: #{tpu_custom_call.1} parent=35 // pred_region
          %300 = dma.done %s293, 256
        $region44: #{tpu_custom_call.1} parent=35 // pred_fallthru
          _
        %s301 = sand.u32 %s26, 1
        %s302 = scalar_lea.sflag [#allocation7], %s301
        %s303 = sand.u32 %s125, 1
        %s304 = smul.addr %s303, 8
        %s305 = scalar_lea.vmem [#allocation8], %s304
        // Predicated region
        $region45: #{tpu_custom_call.1} parent=35 // pred_check
          %p306 = pneg %p138
        $region46: #{tpu_custom_call.1} parent=35 // pred_check_branch
          %308 = sbr.rel (%p306) target = $region48
        $region47: #{tpu_custom_call.1} parent=35 // pred_region
          %309 = dma.done %s302, 128
        $region48: #{tpu_custom_call.1} parent=35 // pred_fallthru
          _
        %s310 = sand.u32 %s48, 1
        %s311 = scalar_lea.sflag [#allocation4], %s310
        %s312 = sand.u32 %s48, 1
        %s313 = smul.addr %s312, 16
        %s314 = scalar_lea.vmem [#allocation3], %s313
        %p315 = pneg %p61
        %p316 = pneg %p58
        %s317 = sand.u32 %s26, 1
        %s318 = scalar_lea.sflag [#allocation7], %s317
        %s319 = sand.u32 %s78, 1
        %s320 = smul.addr %s319, 16
        %s321 = scalar_lea.vmem [#allocation6], %s320
        %p322 = pneg %p91
        %p323 = pneg %p88
        %p324 = pneg %p112
        %p325 = pneg %p109
        %s326 = sand.u32 %s26, 1
        %s327 = scalar_lea.sflag [#allocation7], %s326
        %s328 = sand.u32 %s125, 1
        %s329 = smul.addr %s328, 8
        %s330 = scalar_lea.vmem [#allocation8], %s329
        %p331 = pneg %p138
        %p332 = pneg %p135
        %p333 = pneg %p166
        %p334 = pneg %p163
        %s335 = sand.u32 %s153, 1
        %s336 = scalar_lea.sflag [#allocation5], %s335
        %s337 = sand.u32 %s153, 1
        %s338 = smul.addr %s337, 64
        %s339 = scalar_lea.vmem [#allocation9], %s338
        %p340 = pneg %p192
        %p341 = pneg %p189
        %p342 = scmp.lt.s32.totalorder %s30, 1
        %s343 = scalar_select %p342, %s30, 1
        %s344 = smul.addr %s343, 8
        %s345 = scalar_lea.vmem %s5, %s344
        %s346 = sadd.s32 %s31, 1
        %s347 = smul.u32 8, %s31
        %s348 = smul.u32 8, %s31
        %p349 = scmp.lt.s32.totalorder %s30, 1
        %s350 = scalar_select %p349, %s30, 1
        %s351 = smul.addr %s350, 8
        %s352 = scalar_lea.vmem %s5, %s351
        %v354 = vld [vmem:[%s287] sm:$0xff]
        %v355 = vld [vmem:[%s287 + $0x8] sm:$0xff]
        %v356 = vld [vmem:[%s296] sm:$0xff]
        %v357 = vld [vmem:[%s296 + $0x8] sm:$0xff]
        %v360 = vcombine.high %v354, %v354
        %v362 = vunpack.c.l.s4 1983009808
        %v363 = vunpack.c.0.s8 %v362
        %v364 = vlaneseq
        %v365 = vshrl.u32 %v364, 7
        %v366 = vsub.s32 %v363, %v365
        %v367 = vrot.slane %v354, %v366
        %v369 = vunpack.c.l.s4 1983009808
        %v370 = vunpack.c.0.s8 %v369
        %v371 = vlaneseq
        %v372 = vshrl.u32 %v371, 7
        %v373 = vsub.s32 %v370, %v372
        %v374 = vrot.slane %v360, %v373
        %v375 = vcombine.high %v367, %v367
        %v376 = vcombine.high %v374, %v374
        %v377 = vcombine.high %v355, %v355
        %v379 = vunpack.c.l.s4 1983009808
        %v380 = vunpack.c.0.s8 %v379
        %v381 = vlaneseq
        %v382 = vshrl.u32 %v381, 7
        %v383 = vsub.s32 %v380, %v382
        %v384 = vrot.slane %v355, %v383
        %v386 = vunpack.c.l.s4 1983009808
        %v387 = vunpack.c.0.s8 %v386
        %v388 = vlaneseq
        %v389 = vshrl.u32 %v388, 7
        %v390 = vsub.s32 %v387, %v389
        %v391 = vrot.slane %v377, %v390
        %v392 = vcombine.high %v384, %v384
        %v393 = vcombine.high %v391, %v391
        %v404 = vcombine.high %v356, %v356
        %v406 = vunpack.c.l.s4 1983009808
        %v407 = vunpack.c.0.s8 %v406
        %v408 = vlaneseq
        %v409 = vshrl.u32 %v408, 7
        %v410 = vsub.s32 %v407, %v409
        %v411 = vrot.slane %v356, %v410
        %v413 = vunpack.c.l.s4 1983009808
        %v414 = vunpack.c.0.s8 %v413
        %v415 = vlaneseq
        %v416 = vshrl.u32 %v415, 7
        %v417 = vsub.s32 %v414, %v416
        %v418 = vrot.slane %v404, %v417
        %v419 = vcombine.high %v411, %v411
        %v420 = vcombine.high %v418, %v418
        %v422 = vunpack.c.l.s4 1983009808
        %v423 = vunpack.c.0.s8 %v422
        %v424 = vlaneseq
        %v425 = vshrl.u32 %v424, 7
        %v426 = vsub.s32 %v423, %v425
        %v427 = vrot.slane %v357, %v426
        %v428 = vcombine.high %v427, %v427
        %429 = vst [vmem:[#allocation2] sm:$0x3] %v367
        %430 = vst [vmem:[#allocation2 + $0x8] sm:$0x3] %v375
        %431 = vst [vmem:[#allocation2 + $0x10] sm:$0x3] %v374
        %432 = vst [vmem:[#allocation2 + $0x18] sm:$0x3] %v376
        %433 = vst [vmem:[#allocation2 + $0x20] sm:$0x3] %v384
        %434 = vst [vmem:[#allocation2 + $0x28] sm:$0x3] %v392
        %435 = vst [vmem:[#allocation2 + $0x30] sm:$0x3] %v391
        %436 = vst [vmem:[#allocation2 + $0x38] sm:$0x3] %v393
        %v437 = vrot.slane %v367, 6
        %v438 = vrot.slane %v375, 6
        %v439 = vrot.slane %v374, 6
        %v440 = vrot.slane %v376, 6
        %v441 = vrot.slane %v384, 6
        %v442 = vrot.slane %v392, 6
        %v443 = vrot.slane %v391, 6
        %v444 = vrot.slane %v393, 6
        %v445 = vrot.slane %v411, 6
        %446 = vrot.lane.b32.xlu0 %v437, 127
        %v447 = vpop.permute.xlu0 %446
        %448 = vrot.lane.b32.xlu0 %v438, 127
        %v449 = vpop.permute.xlu0 %448
        %450 = vrot.lane.b32.xlu0 %v439, 127
        %v451 = vpop.permute.xlu0 %450
        %452 = vrot.lane.b32.xlu0 %v440, 127
        %v453 = vpop.permute.xlu0 %452
        %454 = vrot.lane.b32.xlu0 %v441, 127
        %v455 = vpop.permute.xlu0 %454
        %456 = vrot.lane.b32.xlu0 %v442, 127
        %v457 = vpop.permute.xlu0 %456
        %458 = vrot.lane.b32.xlu0 %v443, 127
        %v459 = vpop.permute.xlu0 %458
        %460 = vrot.lane.b32.xlu0 %v444, 127
        %v461 = vpop.permute.xlu0 %460
        %462 = vrot.lane.b32.xlu0 %v445, 127
        %v463 = vpop.permute.xlu0 %462
        %vm464 = vcmask 1039360
        %v465 = vsel %vm464, %v447, %v449
        %v466 = vsel %vm464, %v449, %v451
        %v467 = vsel %vm464, %v451, %v453
        %v468 = vsel %vm464, %v453, %v455
        %v469 = vsel %vm464, %v455, %v457
        %v470 = vsel %vm464, %v457, %v459
        %v471 = vsel %vm464, %v459, %v461
        %v472 = vsel %vm464, %v461, %v463
        %481 = vst [vmem:[#allocation2] sm:$0xc] %v465
        %482 = vst [vmem:[#allocation2 + $0x8] sm:$0xc] %v466
        %483 = vst [vmem:[#allocation2 + $0x10] sm:$0xc] %v467
        %484 = vst [vmem:[#allocation2 + $0x18] sm:$0xc] %v468
        %485 = vst [vmem:[#allocation2 + $0x20] sm:$0xc] %v469
        %486 = vst [vmem:[#allocation2 + $0x28] sm:$0xc] %v470
        %487 = vst [vmem:[#allocation2 + $0x30] sm:$0xc] %v471
        %488 = vst [vmem:[#allocation2 + $0x38] sm:$0xc] %v472
        %v489 = vrot.slane %v367, 4
        %v490 = vrot.slane %v375, 4
        %v491 = vrot.slane %v374, 4
        %v492 = vrot.slane %v376, 4
        %v493 = vrot.slane %v384, 4
        %v494 = vrot.slane %v392, 4
        %v495 = vrot.slane %v391, 4
        %v496 = vrot.slane %v393, 4
        %v497 = vrot.slane %v411, 4
        %498 = vrot.lane.b32.xlu0 %v489, 126
        %v499 = vpop.permute.xlu0 %498
        %500 = vrot.lane.b32.xlu0 %v490, 126
        %v501 = vpop.permute.xlu0 %500
        %502 = vrot.lane.b32.xlu0 %v491, 126
        %v503 = vpop.permute.xlu0 %502
        %504 = vrot.lane.b32.xlu0 %v492, 126
        %v505 = vpop.permute.xlu0 %504
        %506 = vrot.lane.b32.xlu0 %v493, 126
        %v507 = vpop.permute.xlu0 %506
        %508 = vrot.lane.b32.xlu0 %v494, 126
        %v509 = vpop.permute.xlu0 %508
        %510 = vrot.lane.b32.xlu0 %v495, 126
        %v511 = vpop.permute.xlu0 %510
        %512 = vrot.lane.b32.xlu0 %v496, 126
        %v513 = vpop.permute.xlu0 %512
        %514 = vrot.lane.b32.xlu0 %v497, 126
        %v515 = vpop.permute.xlu0 %514
        %vm516 = vcmask 1031168
        %v517 = vsel %vm516, %v499, %v501
        %v518 = vsel %vm516, %v501, %v503
        %v519 = vsel %vm516, %v503, %v505
        %v520 = vsel %vm516, %v505, %v507
        %v521 = vsel %vm516, %v507, %v509
        %v522 = vsel %vm516, %v509, %v511
        %v523 = vsel %vm516, %v511, %v513
        %v524 = vsel %vm516, %v513, %v515
        %533 = vst [vmem:[#allocation2] sm:$0x30] %v517
        %534 = vst [vmem:[#allocation2 + $0x8] sm:$0x30] %v518
        %535 = vst [vmem:[#allocation2 + $0x10] sm:$0x30] %v519
        %536 = vst [vmem:[#allocation2 + $0x18] sm:$0x30] %v520
        %537 = vst [vmem:[#allocation2 + $0x20] sm:$0x30] %v521
        %538 = vst [vmem:[#allocation2 + $0x28] sm:$0x30] %v522
        %539 = vst [vmem:[#allocation2 + $0x30] sm:$0x30] %v523
        %540 = vst [vmem:[#allocation2 + $0x38] sm:$0x30] %v524
        %v541 = vrot.slane %v367, 2
        %v542 = vrot.slane %v375, 2
        %v543 = vrot.slane %v374, 2
        %v544 = vrot.slane %v376, 2
        %v545 = vrot.slane %v384, 2
        %v546 = vrot.slane %v392, 2
        %v547 = vrot.slane %v391, 2
        %v548 = vrot.slane %v393, 2
        %v549 = vrot.slane %v411, 2
        %550 = vrot.lane.b32.xlu0 %v541, 110
        %v551 = vpop.permute.xlu0 %550
        %552 = vrot.lane.b32.xlu0 %v542, 110
        %v553 = vpop.permute.xlu0 %552
        %554 = vrot.lane.b32.xlu0 %v543, 110
        %v555 = vpop.permute.xlu0 %554
        %556 = vrot.lane.b32.xlu0 %v544, 110
        %v557 = vpop.permute.xlu0 %556
        %558 = vrot.lane.b32.xlu0 %v545, 110
        %v559 = vpop.permute.xlu0 %558
        %560 = vrot.lane.b32.xlu0 %v546, 110
        %v561 = vpop.permute.xlu0 %560
        %562 = vrot.lane.b32.xlu0 %v547, 110
        %v563 = vpop.permute.xlu0 %562
        %564 = vrot.lane.b32.xlu0 %v548, 110
        %v565 = vpop.permute.xlu0 %564
        %566 = vrot.lane.b32.xlu0 %v549, 110
        %v567 = vpop.permute.xlu0 %566
        %vm568 = vcmask 900096
        %v569 = vsel %vm568, %v551, %v553
        %v570 = vsel %vm568, %v553, %v555
        %v571 = vsel %vm568, %v555, %v557
        %v572 = vsel %vm568, %v557, %v559
        %v573 = vsel %vm568, %v559, %v561
        %v574 = vsel %vm568, %v561, %v563
        %v575 = vsel %vm568, %v563, %v565
        %v576 = vsel %vm568, %v565, %v567
        %585 = vst [vmem:[#allocation2] sm:$0xc0] %v569
        %586 = vst [vmem:[#allocation2 + $0x8] sm:$0xc0] %v570
        %587 = vst [vmem:[#allocation2 + $0x10] sm:$0xc0] %v571
        %588 = vst [vmem:[#allocation2 + $0x18] sm:$0xc0] %v572
        %589 = vst [vmem:[#allocation2 + $0x20] sm:$0xc0] %v573
        %590 = vst [vmem:[#allocation2 + $0x28] sm:$0xc0] %v574
        %591 = vst [vmem:[#allocation2 + $0x30] sm:$0xc0] %v575
        %592 = vst [vmem:[#allocation2 + $0x38] sm:$0xc0] %v576
        %593 = vrot.lane.b32.xlu0 %v367, 109
        %v594 = vpop.permute.xlu0 %593
        %595 = vrot.lane.b32.xlu0 %v375, 109
        %v596 = vpop.permute.xlu0 %595
        %597 = vrot.lane.b32.xlu0 %v374, 109
        %v598 = vpop.permute.xlu0 %597
        %599 = vrot.lane.b32.xlu0 %v376, 109
        %v600 = vpop.permute.xlu0 %599
        %601 = vrot.lane.b32.xlu0 %v384, 109
        %v602 = vpop.permute.xlu0 %601
        %603 = vrot.lane.b32.xlu0 %v392, 109
        %v604 = vpop.permute.xlu0 %603
        %605 = vrot.lane.b32.xlu0 %v391, 109
        %v606 = vpop.permute.xlu0 %605
        %607 = vrot.lane.b32.xlu0 %v393, 109
        %v608 = vpop.permute.xlu0 %607
        %609 = vrot.lane.b32.xlu0 %v411, 109
        %v610 = vpop.permute.xlu0 %609
        %vm611 = vcmask 891904
        %v612 = vsel %vm611, %v594, %v596
        %v613 = vsel %vm611, %v596, %v598
        %v614 = vsel %vm611, %v598, %v600
        %v615 = vsel %vm611, %v600, %v602
        %v616 = vsel %vm611, %v602, %v604
        %v617 = vsel %vm611, %v604, %v606
        %v618 = vsel %vm611, %v606, %v608
        %v619 = vsel %vm611, %v608, %v610
        %628 = vst [vmem:[#allocation2 + $0x40] sm:$0x3] %v612
        %629 = vst [vmem:[#allocation2 + $0x48] sm:$0x3] %v613
        %630 = vst [vmem:[#allocation2 + $0x50] sm:$0x3] %v614
        %631 = vst [vmem:[#allocation2 + $0x58] sm:$0x3] %v615
        %632 = vst [vmem:[#allocation2 + $0x60] sm:$0x3] %v616
        %633 = vst [vmem:[#allocation2 + $0x68] sm:$0x3] %v617
        %634 = vst [vmem:[#allocation2 + $0x70] sm:$0x3] %v618
        %635 = vst [vmem:[#allocation2 + $0x78] sm:$0x3] %v619
        %636 = vrot.lane.b32.xlu0 %v437, 108
        %v637 = vpop.permute.xlu0 %636
        %638 = vrot.lane.b32.xlu0 %v438, 108
        %v639 = vpop.permute.xlu0 %638
        %640 = vrot.lane.b32.xlu0 %v439, 108
        %v641 = vpop.permute.xlu0 %640
        %642 = vrot.lane.b32.xlu0 %v440, 108
        %v643 = vpop.permute.xlu0 %642
        %644 = vrot.lane.b32.xlu0 %v441, 108
        %v645 = vpop.permute.xlu0 %644
        %646 = vrot.lane.b32.xlu0 %v442, 108
        %v647 = vpop.permute.xlu0 %646
        %648 = vrot.lane.b32.xlu0 %v443, 108
        %v649 = vpop.permute.xlu0 %648
        %650 = vrot.lane.b32.xlu0 %v444, 108
        %v651 = vpop.permute.xlu0 %650
        %652 = vrot.lane.b32.xlu0 %v445, 108
        %v653 = vpop.permute.xlu0 %652
        %vm654 = vcmask 883712
        %v655 = vsel %vm654, %v637, %v639
        %v656 = vsel %vm654, %v639, %v641
        %v657 = vsel %vm654, %v641, %v643
        %v658 = vsel %vm654, %v643, %v645
        %v659 = vsel %vm654, %v645, %v647
        %v660 = vsel %vm654, %v647, %v649
        %v661 = vsel %vm654, %v649, %v651
        %v662 = vsel %vm654, %v651, %v653
        %671 = vst [vmem:[#allocation2 + $0x40] sm:$0xc] %v655
        %672 = vst [vmem:[#allocation2 + $0x48] sm:$0xc] %v656
        %673 = vst [vmem:[#allocation2 + $0x50] sm:$0xc] %v657
        %674 = vst [vmem:[#allocation2 + $0x58] sm:$0xc] %v658
        %675 = vst [vmem:[#allocation2 + $0x60] sm:$0xc] %v659
        %676 = vst [vmem:[#allocation2 + $0x68] sm:$0xc] %v660
        %677 = vst [vmem:[#allocation2 + $0x70] sm:$0xc] %v661
        %678 = vst [vmem:[#allocation2 + $0x78] sm:$0xc] %v662
        %679 = vrot.lane.b32.xlu0 %v489, 92
        %v680 = vpop.permute.xlu0 %679
        %681 = vrot.lane.b32.xlu0 %v490, 92
        %v682 = vpop.permute.xlu0 %681
        %683 = vrot.lane.b32.xlu0 %v491, 92
        %v684 = vpop.permute.xlu0 %683
        %685 = vrot.lane.b32.xlu0 %v492, 92
        %v686 = vpop.permute.xlu0 %685
        %687 = vrot.lane.b32.xlu0 %v493, 92
        %v688 = vpop.permute.xlu0 %687
        %689 = vrot.lane.b32.xlu0 %v494, 92
        %v690 = vpop.permute.xlu0 %689
        %691 = vrot.lane.b32.xlu0 %v495, 92
        %v692 = vpop.permute.xlu0 %691
        %693 = vrot.lane.b32.xlu0 %v496, 92
        %v694 = vpop.permute.xlu0 %693
        %695 = vrot.lane.b32.xlu0 %v497, 92
        %v696 = vpop.permute.xlu0 %695
        %vm697 = vcmask 752640
        %v698 = vsel %vm697, %v680, %v682
        %v699 = vsel %vm697, %v682, %v684
        %v700 = vsel %vm697, %v684, %v686
        %v701 = vsel %vm697, %v686, %v688
        %v702 = vsel %vm697, %v688, %v690
        %v703 = vsel %vm697, %v690, %v692
        %v704 = vsel %vm697, %v692, %v694
        %v705 = vsel %vm697, %v694, %v696
        %714 = vst [vmem:[#allocation2 + $0x40] sm:$0x30] %v698
        %715 = vst [vmem:[#allocation2 + $0x48] sm:$0x30] %v699
        %716 = vst [vmem:[#allocation2 + $0x50] sm:$0x30] %v700
        %717 = vst [vmem:[#allocation2 + $0x58] sm:$0x30] %v701
        %718 = vst [vmem:[#allocation2 + $0x60] sm:$0x30] %v702
        %719 = vst [vmem:[#allocation2 + $0x68] sm:$0x30] %v703
        %720 = vst [vmem:[#allocation2 + $0x70] sm:$0x30] %v704
        %721 = vst [vmem:[#allocation2 + $0x78] sm:$0x30] %v705
        %722 = vrot.lane.b32.xlu0 %v541, 91
        %v723 = vpop.permute.xlu0 %722
        %724 = vrot.lane.b32.xlu0 %v542, 91
        %v725 = vpop.permute.xlu0 %724
        %726 = vrot.lane.b32.xlu0 %v543, 91
        %v727 = vpop.permute.xlu0 %726
        %728 = vrot.lane.b32.xlu0 %v544, 91
        %v729 = vpop.permute.xlu0 %728
        %730 = vrot.lane.b32.xlu0 %v545, 91
        %v731 = vpop.permute.xlu0 %730
        %732 = vrot.lane.b32.xlu0 %v546, 91
        %v733 = vpop.permute.xlu0 %732
        %734 = vrot.lane.b32.xlu0 %v547, 91
        %v735 = vpop.permute.xlu0 %734
        %736 = vrot.lane.b32.xlu0 %v548, 91
        %v737 = vpop.permute.xlu0 %736
        %738 = vrot.lane.b32.xlu0 %v549, 91
        %v739 = vpop.permute.xlu0 %738
        %vm740 = vcmask 744448
        %v741 = vsel %vm740, %v723, %v725
        %v742 = vsel %vm740, %v725, %v727
        %v743 = vsel %vm740, %v727, %v729
        %v744 = vsel %vm740, %v729, %v731
        %v745 = vsel %vm740, %v731, %v733
        %v746 = vsel %vm740, %v733, %v735
        %v747 = vsel %vm740, %v735, %v737
        %v748 = vsel %vm740, %v737, %v739
        %757 = vst [vmem:[#allocation2 + $0x40] sm:$0xc0] %v741
        %758 = vst [vmem:[#allocation2 + $0x48] sm:$0xc0] %v742
        %759 = vst [vmem:[#allocation2 + $0x50] sm:$0xc0] %v743
        %760 = vst [vmem:[#allocation2 + $0x58] sm:$0xc0] %v744
        %761 = vst [vmem:[#allocation2 + $0x60] sm:$0xc0] %v745
        %762 = vst [vmem:[#allocation2 + $0x68] sm:$0xc0] %v746
        %763 = vst [vmem:[#allocation2 + $0x70] sm:$0xc0] %v747
        %764 = vst [vmem:[#allocation2 + $0x78] sm:$0xc0] %v748
        %765 = vrot.lane.b32.xlu0 %v367, 90
        %v766 = vpop.permute.xlu0 %765
        %767 = vrot.lane.b32.xlu0 %v375, 90
        %v768 = vpop.permute.xlu0 %767
        %769 = vrot.lane.b32.xlu0 %v374, 90
        %v770 = vpop.permute.xlu0 %769
        %771 = vrot.lane.b32.xlu0 %v376, 90
        %v772 = vpop.permute.xlu0 %771
        %773 = vrot.lane.b32.xlu0 %v384, 90
        %v774 = vpop.permute.xlu0 %773
        %775 = vrot.lane.b32.xlu0 %v392, 90
        %v776 = vpop.permute.xlu0 %775
        %777 = vrot.lane.b32.xlu0 %v391, 90
        %v778 = vpop.permute.xlu0 %777
        %779 = vrot.lane.b32.xlu0 %v393, 90
        %v780 = vpop.permute.xlu0 %779
        %781 = vrot.lane.b32.xlu0 %v411, 90
        %v782 = vpop.permute.xlu0 %781
        %vm783 = vcmask 736256
        %v784 = vsel %vm783, %v766, %v768
        %v785 = vsel %vm783, %v768, %v770
        %v786 = vsel %vm783, %v770, %v772
        %v787 = vsel %vm783, %v772, %v774
        %v788 = vsel %vm783, %v774, %v776
        %v789 = vsel %vm783, %v776, %v778
        %v790 = vsel %vm783, %v778, %v780
        %v791 = vsel %vm783, %v780, %v782
        %800 = vst [vmem:[#allocation2 + $0x80] sm:$0x3] %v784
        %801 = vst [vmem:[#allocation2 + $0x88] sm:$0x3] %v785
        %802 = vst [vmem:[#allocation2 + $0x90] sm:$0x3] %v786
        %803 = vst [vmem:[#allocation2 + $0x98] sm:$0x3] %v787
        %804 = vst [vmem:[#allocation2 + $0xa0] sm:$0x3] %v788
        %805 = vst [vmem:[#allocation2 + $0xa8] sm:$0x3] %v789
        %806 = vst [vmem:[#allocation2 + $0xb0] sm:$0x3] %v790
        %807 = vst [vmem:[#allocation2 + $0xb8] sm:$0x3] %v791
        %v808 = vrot.slane %v419, 6
        %v809 = vrot.slane %v418, 6
        %810 = vrot.lane.b32.xlu0 %v439, 60
        %v811 = vpop.permute.xlu0 %810
        %812 = vrot.lane.b32.xlu0 %v440, 60
        %v813 = vpop.permute.xlu0 %812
        %814 = vrot.lane.b32.xlu0 %v441, 60
        %v815 = vpop.permute.xlu0 %814
        %816 = vrot.lane.b32.xlu0 %v442, 60
        %v817 = vpop.permute.xlu0 %816
        %818 = vrot.lane.b32.xlu0 %v443, 60
        %v819 = vpop.permute.xlu0 %818
        %820 = vrot.lane.b32.xlu0 %v444, 60
        %v821 = vpop.permute.xlu0 %820
        %822 = vrot.lane.b32.xlu0 %v445, 60
        %v823 = vpop.permute.xlu0 %822
        %824 = vrot.lane.b32.xlu0 %v808, 60
        %v825 = vpop.permute.xlu0 %824
        %826 = vrot.lane.b32.xlu0 %v809, 60
        %v827 = vpop.permute.xlu0 %826
        %vm828 = vcmask 490496
        %v829 = vsel %vm828, %v811, %v813
        %v830 = vsel %vm828, %v813, %v815
        %v831 = vsel %vm828, %v815, %v817
        %v832 = vsel %vm828, %v817, %v819
        %v833 = vsel %vm828, %v819, %v821
        %v834 = vsel %vm828, %v821, %v823
        %v835 = vsel %vm828, %v823, %v825
        %v836 = vsel %vm828, %v825, %v827
        %845 = vst [vmem:[#allocation2 + $0x80] sm:$0xc] %v829
        %846 = vst [vmem:[#allocation2 + $0x88] sm:$0xc] %v830
        %847 = vst [vmem:[#allocation2 + $0x90] sm:$0xc] %v831
        %848 = vst [vmem:[#allocation2 + $0x98] sm:$0xc] %v832
        %849 = vst [vmem:[#allocation2 + $0xa0] sm:$0xc] %v833
        %850 = vst [vmem:[#allocation2 + $0xa8] sm:$0xc] %v834
        %851 = vst [vmem:[#allocation2 + $0xb0] sm:$0xc] %v835
        %852 = vst [vmem:[#allocation2 + $0xb8] sm:$0xc] %v836
        %v853 = vrot.slane %v419, 4
        %v854 = vrot.slane %v418, 4
        %855 = vrot.lane.b32.xlu0 %v491, 59
        %v856 = vpop.permute.xlu0 %855
        %857 = vrot.lane.b32.xlu0 %v492, 59
        %v858 = vpop.permute.xlu0 %857
        %859 = vrot.lane.b32.xlu0 %v493, 59
        %v860 = vpop.permute.xlu0 %859
        %861 = vrot.lane.b32.xlu0 %v494, 59
        %v862 = vpop.permute.xlu0 %861
        %863 = vrot.lane.b32.xlu0 %v495, 59
        %v864 = vpop.permute.xlu0 %863
        %865 = vrot.lane.b32.xlu0 %v496, 59
        %v866 = vpop.permute.xlu0 %865
        %867 = vrot.lane.b32.xlu0 %v497, 59
        %v868 = vpop.permute.xlu0 %867
        %869 = vrot.lane.b32.xlu0 %v853, 59
        %v870 = vpop.permute.xlu0 %869
        %871 = vrot.lane.b32.xlu0 %v854, 59
        %v872 = vpop.permute.xlu0 %871
        %vm873 = vcmask 482304
        %v874 = vsel %vm873, %v856, %v858
        %v875 = vsel %vm873, %v858, %v860
        %v876 = vsel %vm873, %v860, %v862
        %v877 = vsel %vm873, %v862, %v864
        %v878 = vsel %vm873, %v864, %v866
        %v879 = vsel %vm873, %v866, %v868
        %v880 = vsel %vm873, %v868, %v870
        %v881 = vsel %vm873, %v870, %v872
        %890 = vst [vmem:[#allocation2 + $0x80] sm:$0x30] %v874
        %891 = vst [vmem:[#allocation2 + $0x88] sm:$0x30] %v875
        %892 = vst [vmem:[#allocation2 + $0x90] sm:$0x30] %v876
        %893 = vst [vmem:[#allocation2 + $0x98] sm:$0x30] %v877
        %894 = vst [vmem:[#allocation2 + $0xa0] sm:$0x30] %v878
        %895 = vst [vmem:[#allocation2 + $0xa8] sm:$0x30] %v879
        %896 = vst [vmem:[#allocation2 + $0xb0] sm:$0x30] %v880
        %897 = vst [vmem:[#allocation2 + $0xb8] sm:$0x30] %v881
        %v898 = vrot.slane %v419, 2
        %v899 = vrot.slane %v418, 2
        %900 = vrot.lane.b32.xlu0 %v543, 58
        %v901 = vpop.permute.xlu0 %900
        %902 = vrot.lane.b32.xlu0 %v544, 58
        %v903 = vpop.permute.xlu0 %902
        %904 = vrot.lane.b32.xlu0 %v545, 58
        %v905 = vpop.permute.xlu0 %904
        %906 = vrot.lane.b32.xlu0 %v546, 58
        %v907 = vpop.permute.xlu0 %906
        %908 = vrot.lane.b32.xlu0 %v547, 58
        %v909 = vpop.permute.xlu0 %908
        %910 = vrot.lane.b32.xlu0 %v548, 58
        %v911 = vpop.permute.xlu0 %910
        %912 = vrot.lane.b32.xlu0 %v549, 58
        %v913 = vpop.permute.xlu0 %912
        %914 = vrot.lane.b32.xlu0 %v898, 58
        %v915 = vpop.permute.xlu0 %914
        %916 = vrot.lane.b32.xlu0 %v899, 58
        %v917 = vpop.permute.xlu0 %916
        %vm918 = vcmask 474112
        %v919 = vsel %vm918, %v901, %v903
        %v920 = vsel %vm918, %v903, %v905
        %v921 = vsel %vm918, %v905, %v907
        %v922 = vsel %vm918, %v907, %v909
        %v923 = vsel %vm918, %v909, %v911
        %v924 = vsel %vm918, %v911, %v913
        %v925 = vsel %vm918, %v913, %v915
        %v926 = vsel %vm918, %v915, %v917
        %935 = vst [vmem:[#allocation2 + $0x80] sm:$0xc0] %v919
        %936 = vst [vmem:[#allocation2 + $0x88] sm:$0xc0] %v920
        %937 = vst [vmem:[#allocation2 + $0x90] sm:$0xc0] %v921
        %938 = vst [vmem:[#allocation2 + $0x98] sm:$0xc0] %v922
        %939 = vst [vmem:[#allocation2 + $0xa0] sm:$0xc0] %v923
        %940 = vst [vmem:[#allocation2 + $0xa8] sm:$0xc0] %v924
        %941 = vst [vmem:[#allocation2 + $0xb0] sm:$0xc0] %v925
        %942 = vst [vmem:[#allocation2 + $0xb8] sm:$0xc0] %v926
        %943 = vrot.lane.b32.xlu0 %v374, 42
        %v944 = vpop.permute.xlu0 %943
        %945 = vrot.lane.b32.xlu0 %v376, 42
        %v946 = vpop.permute.xlu0 %945
        %947 = vrot.lane.b32.xlu0 %v384, 42
        %v948 = vpop.permute.xlu0 %947
        %949 = vrot.lane.b32.xlu0 %v392, 42
        %v950 = vpop.permute.xlu0 %949
        %951 = vrot.lane.b32.xlu0 %v391, 42
        %v952 = vpop.permute.xlu0 %951
        %953 = vrot.lane.b32.xlu0 %v393, 42
        %v954 = vpop.permute.xlu0 %953
        %955 = vrot.lane.b32.xlu0 %v411, 42
        %v956 = vpop.permute.xlu0 %955
        %957 = vrot.lane.b32.xlu0 %v419, 42
        %v958 = vpop.permute.xlu0 %957
        %959 = vrot.lane.b32.xlu0 %v418, 42
        %v960 = vpop.permute.xlu0 %959
        %vm961 = vcmask 343040
        %v962 = vsel %vm961, %v944, %v946
        %v963 = vsel %vm961, %v946, %v948
        %v964 = vsel %vm961, %v948, %v950
        %v965 = vsel %vm961, %v950, %v952
        %v966 = vsel %vm961, %v952, %v954
        %v967 = vsel %vm961, %v954, %v956
        %v968 = vsel %vm961, %v956, %v958
        %v969 = vsel %vm961, %v958, %v960
        %978 = vst [vmem:[#allocation2 + $0xc0] sm:$0x3] %v962
        %979 = vst [vmem:[#allocation2 + $0xc8] sm:$0x3] %v963
        %980 = vst [vmem:[#allocation2 + $0xd0] sm:$0x3] %v964
        %981 = vst [vmem:[#allocation2 + $0xd8] sm:$0x3] %v965
        %982 = vst [vmem:[#allocation2 + $0xe0] sm:$0x3] %v966
        %983 = vst [vmem:[#allocation2 + $0xe8] sm:$0x3] %v967
        %984 = vst [vmem:[#allocation2 + $0xf0] sm:$0x3] %v968
        %985 = vst [vmem:[#allocation2 + $0xf8] sm:$0x3] %v969
        %986 = vrot.lane.b32.xlu0 %v439, 41
        %v987 = vpop.permute.xlu0 %986
        %988 = vrot.lane.b32.xlu0 %v440, 41
        %v989 = vpop.permute.xlu0 %988
        %990 = vrot.lane.b32.xlu0 %v441, 41
        %v991 = vpop.permute.xlu0 %990
        %992 = vrot.lane.b32.xlu0 %v442, 41
        %v993 = vpop.permute.xlu0 %992
        %994 = vrot.lane.b32.xlu0 %v443, 41
        %v995 = vpop.permute.xlu0 %994
        %996 = vrot.lane.b32.xlu0 %v444, 41
        %v997 = vpop.permute.xlu0 %996
        %998 = vrot.lane.b32.xlu0 %v445, 41
        %v999 = vpop.permute.xlu0 %998
        %1000 = vrot.lane.b32.xlu0 %v808, 41
        %v1001 = vpop.permute.xlu0 %1000
        %1002 = vrot.lane.b32.xlu0 %v809, 41
        %v1003 = vpop.permute.xlu0 %1002
        %vm1004 = vcmask 334848
        %v1005 = vsel %vm1004, %v987, %v989
        %v1006 = vsel %vm1004, %v989, %v991
        %v1007 = vsel %vm1004, %v991, %v993
        %v1008 = vsel %vm1004, %v993, %v995
        %v1009 = vsel %vm1004, %v995, %v997
        %v1010 = vsel %vm1004, %v997, %v999
        %v1011 = vsel %vm1004, %v999, %v1001
        %v1012 = vsel %vm1004, %v1001, %v1003
        %1021 = vst [vmem:[#allocation2 + $0xc0] sm:$0xc] %v1005
        %1022 = vst [vmem:[#allocation2 + $0xc8] sm:$0xc] %v1006
        %1023 = vst [vmem:[#allocation2 + $0xd0] sm:$0xc] %v1007
        %1024 = vst [vmem:[#allocation2 + $0xd8] sm:$0xc] %v1008
        %1025 = vst [vmem:[#allocation2 + $0xe0] sm:$0xc] %v1009
        %1026 = vst [vmem:[#allocation2 + $0xe8] sm:$0xc] %v1010
        %1027 = vst [vmem:[#allocation2 + $0xf0] sm:$0xc] %v1011
        %1028 = vst [vmem:[#allocation2 + $0xf8] sm:$0xc] %v1012
        %1029 = vrot.lane.b32.xlu0 %v491, 40
        %v1030 = vpop.permute.xlu0 %1029
        %1031 = vrot.lane.b32.xlu0 %v492, 40
        %v1032 = vpop.permute.xlu0 %1031
        %1033 = vrot.lane.b32.xlu0 %v493, 40
        %v1034 = vpop.permute.xlu0 %1033
        %1035 = vrot.lane.b32.xlu0 %v494, 40
        %v1036 = vpop.permute.xlu0 %1035
        %1037 = vrot.lane.b32.xlu0 %v495, 40
        %v1038 = vpop.permute.xlu0 %1037
        %1039 = vrot.lane.b32.xlu0 %v496, 40
        %v1040 = vpop.permute.xlu0 %1039
        %1041 = vrot.lane.b32.xlu0 %v497, 40
        %v1042 = vpop.permute.xlu0 %1041
        %1043 = vrot.lane.b32.xlu0 %v853, 40
        %v1044 = vpop.permute.xlu0 %1043
        %1045 = vrot.lane.b32.xlu0 %v854, 40
        %v1046 = vpop.permute.xlu0 %1045
        %vm1047 = vcmask 326656
        %v1048 = vsel %vm1047, %v1030, %v1032
        %v1049 = vsel %vm1047, %v1032, %v1034
        %v1050 = vsel %vm1047, %v1034, %v1036
        %v1051 = vsel %vm1047, %v1036, %v1038
        %v1052 = vsel %vm1047, %v1038, %v1040
        %v1053 = vsel %vm1047, %v1040, %v1042
        %v1054 = vsel %vm1047, %v1042, %v1044
        %v1055 = vsel %vm1047, %v1044, %v1046
        %1064 = vst [vmem:[#allocation2 + $0xc0] sm:$0x30] %v1048
        %1065 = vst [vmem:[#allocation2 + $0xc8] sm:$0x30] %v1049
        %1066 = vst [vmem:[#allocation2 + $0xd0] sm:$0x30] %v1050
        %1067 = vst [vmem:[#allocation2 + $0xd8] sm:$0x30] %v1051
        %1068 = vst [vmem:[#allocation2 + $0xe0] sm:$0x30] %v1052
        %1069 = vst [vmem:[#allocation2 + $0xe8] sm:$0x30] %v1053
        %1070 = vst [vmem:[#allocation2 + $0xf0] sm:$0x30] %v1054
        %1071 = vst [vmem:[#allocation2 + $0xf8] sm:$0x30] %v1055
        %1072 = vrot.lane.b32.xlu0 %v543, 24
        %v1073 = vpop.permute.xlu0 %1072
        %1074 = vrot.lane.b32.xlu0 %v544, 24
        %v1075 = vpop.permute.xlu0 %1074
        %1076 = vrot.lane.b32.xlu0 %v545, 24
        %v1077 = vpop.permute.xlu0 %1076
        %1078 = vrot.lane.b32.xlu0 %v546, 24
        %v1079 = vpop.permute.xlu0 %1078
        %1080 = vrot.lane.b32.xlu0 %v547, 24
        %v1081 = vpop.permute.xlu0 %1080
        %1082 = vrot.lane.b32.xlu0 %v548, 24
        %v1083 = vpop.permute.xlu0 %1082
        %1084 = vrot.lane.b32.xlu0 %v549, 24
        %v1085 = vpop.permute.xlu0 %1084
        %1086 = vrot.lane.b32.xlu0 %v898, 24
        %v1087 = vpop.permute.xlu0 %1086
        %1088 = vrot.lane.b32.xlu0 %v899, 24
        %v1089 = vpop.permute.xlu0 %1088
        %vm1090 = vcmask 195584
        %v1091 = vsel %vm1090, %v1073, %v1075
        %v1092 = vsel %vm1090, %v1075, %v1077
        %v1093 = vsel %vm1090, %v1077, %v1079
        %v1094 = vsel %vm1090, %v1079, %v1081
        %v1095 = vsel %vm1090, %v1081, %v1083
        %v1096 = vsel %vm1090, %v1083, %v1085
        %v1097 = vsel %vm1090, %v1085, %v1087
        %v1098 = vsel %vm1090, %v1087, %v1089
        %1107 = vst [vmem:[#allocation2 + $0xc0] sm:$0xc0] %v1091
        %1108 = vst [vmem:[#allocation2 + $0xc8] sm:$0xc0] %v1092
        %1109 = vst [vmem:[#allocation2 + $0xd0] sm:$0xc0] %v1093
        %1110 = vst [vmem:[#allocation2 + $0xd8] sm:$0xc0] %v1094
        %1111 = vst [vmem:[#allocation2 + $0xe0] sm:$0xc0] %v1095
        %1112 = vst [vmem:[#allocation2 + $0xe8] sm:$0xc0] %v1096
        %1113 = vst [vmem:[#allocation2 + $0xf0] sm:$0xc0] %v1097
        %1114 = vst [vmem:[#allocation2 + $0xf8] sm:$0xc0] %v1098
        %1115 = vrot.lane.b32.xlu0 %v374, 23
        %v1116 = vpop.permute.xlu0 %1115
        %1117 = vrot.lane.b32.xlu0 %v376, 23
        %v1118 = vpop.permute.xlu0 %1117
        %1119 = vrot.lane.b32.xlu0 %v384, 23
        %v1120 = vpop.permute.xlu0 %1119
        %1121 = vrot.lane.b32.xlu0 %v392, 23
        %v1122 = vpop.permute.xlu0 %1121
        %1123 = vrot.lane.b32.xlu0 %v391, 23
        %v1124 = vpop.permute.xlu0 %1123
        %1125 = vrot.lane.b32.xlu0 %v393, 23
        %v1126 = vpop.permute.xlu0 %1125
        %1127 = vrot.lane.b32.xlu0 %v411, 23
        %v1128 = vpop.permute.xlu0 %1127
        %1129 = vrot.lane.b32.xlu0 %v419, 23
        %v1130 = vpop.permute.xlu0 %1129
        %1131 = vrot.lane.b32.xlu0 %v418, 23
        %v1132 = vpop.permute.xlu0 %1131
        %vm1133 = vcmask 187392
        %v1134 = vsel %vm1133, %v1116, %v1118
        %v1135 = vsel %vm1133, %v1118, %v1120
        %v1136 = vsel %vm1133, %v1120, %v1122
        %v1137 = vsel %vm1133, %v1122, %v1124
        %v1138 = vsel %vm1133, %v1124, %v1126
        %v1139 = vsel %vm1133, %v1126, %v1128
        %v1140 = vsel %vm1133, %v1128, %v1130
        %v1141 = vsel %vm1133, %v1130, %v1132
        %1150 = vst [vmem:[#allocation2 + $0x100] sm:$0x3] %v1134
        %1151 = vst [vmem:[#allocation2 + $0x108] sm:$0x3] %v1135
        %1152 = vst [vmem:[#allocation2 + $0x110] sm:$0x3] %v1136
        %1153 = vst [vmem:[#allocation2 + $0x118] sm:$0x3] %v1137
        %1154 = vst [vmem:[#allocation2 + $0x120] sm:$0x3] %v1138
        %1155 = vst [vmem:[#allocation2 + $0x128] sm:$0x3] %v1139
        %1156 = vst [vmem:[#allocation2 + $0x130] sm:$0x3] %v1140
        %1157 = vst [vmem:[#allocation2 + $0x138] sm:$0x3] %v1141
        %1158 = vrot.lane.b32.xlu0 %v439, 22
        %v1159 = vpop.permute.xlu0 %1158
        %1160 = vrot.lane.b32.xlu0 %v440, 22
        %v1161 = vpop.permute.xlu0 %1160
        %1162 = vrot.lane.b32.xlu0 %v441, 22
        %v1163 = vpop.permute.xlu0 %1162
        %1164 = vrot.lane.b32.xlu0 %v442, 22
        %v1165 = vpop.permute.xlu0 %1164
        %1166 = vrot.lane.b32.xlu0 %v443, 22
        %v1167 = vpop.permute.xlu0 %1166
        %1168 = vrot.lane.b32.xlu0 %v444, 22
        %v1169 = vpop.permute.xlu0 %1168
        %1170 = vrot.lane.b32.xlu0 %v445, 22
        %v1171 = vpop.permute.xlu0 %1170
        %1172 = vrot.lane.b32.xlu0 %v808, 22
        %v1173 = vpop.permute.xlu0 %1172
        %1174 = vrot.lane.b32.xlu0 %v809, 22
        %v1175 = vpop.permute.xlu0 %1174
        %vm1176 = vcmask 179200
        %v1177 = vsel %vm1176, %v1159, %v1161
        %v1178 = vsel %vm1176, %v1161, %v1163
        %v1179 = vsel %vm1176, %v1163, %v1165
        %v1180 = vsel %vm1176, %v1165, %v1167
        %v1181 = vsel %vm1176, %v1167, %v1169
        %v1182 = vsel %vm1176, %v1169, %v1171
        %v1183 = vsel %vm1176, %v1171, %v1173
        %v1184 = vsel %vm1176, %v1173, %v1175
        %1193 = vst [vmem:[#allocation2 + $0x100] sm:$0xc] %v1177
        %1194 = vst [vmem:[#allocation2 + $0x108] sm:$0xc] %v1178
        %1195 = vst [vmem:[#allocation2 + $0x110] sm:$0xc] %v1179
        %1196 = vst [vmem:[#allocation2 + $0x118] sm:$0xc] %v1180
        %1197 = vst [vmem:[#allocation2 + $0x120] sm:$0xc] %v1181
        %1198 = vst [vmem:[#allocation2 + $0x128] sm:$0xc] %v1182
        %1199 = vst [vmem:[#allocation2 + $0x130] sm:$0xc] %v1183
        %1200 = vst [vmem:[#allocation2 + $0x138] sm:$0xc] %v1184
        %v1201 = vrot.slane %v420, 4
        %v1202 = vrot.slane %v427, 4
        %v1203 = vrot.slane %v428, 4
        %1204 = vrot.lane.b32.xlu0 %v494, 120
        %v1205 = vpop.permute.xlu0 %1204
        %1206 = vrot.lane.b32.xlu0 %v495, 120
        %v1207 = vpop.permute.xlu0 %1206
        %1208 = vrot.lane.b32.xlu0 %v496, 120
        %v1209 = vpop.permute.xlu0 %1208
        %1210 = vrot.lane.b32.xlu0 %v497, 120
        %v1211 = vpop.permute.xlu0 %1210
        %1212 = vrot.lane.b32.xlu0 %v853, 120
        %v1213 = vpop.permute.xlu0 %1212
        %1214 = vrot.lane.b32.xlu0 %v854, 120
        %v1215 = vpop.permute.xlu0 %1214
        %1216 = vrot.lane.b32.xlu0 %v1201, 120
        %v1217 = vpop.permute.xlu0 %1216
        %1218 = vrot.lane.b32.xlu0 %v1202, 120
        %v1219 = vpop.permute.xlu0 %1218
        %1220 = vrot.lane.b32.xlu0 %v1203, 120
        %v1221 = vpop.permute.xlu0 %1220
        %vm1222 = vcmask 982016
        %v1223 = vsel %vm1222, %v1205, %v1207
        %v1224 = vsel %vm1222, %v1207, %v1209
        %v1225 = vsel %vm1222, %v1209, %v1211
        %v1226 = vsel %vm1222, %v1211, %v1213
        %v1227 = vsel %vm1222, %v1213, %v1215
        %v1228 = vsel %vm1222, %v1215, %v1217
        %v1229 = vsel %vm1222, %v1217, %v1219
        %v1230 = vsel %vm1222, %v1219, %v1221
        %1239 = vst [vmem:[#allocation2 + $0x100] sm:$0x30] %v1223
        %1240 = vst [vmem:[#allocation2 + $0x108] sm:$0x30] %v1224
        %1241 = vst [vmem:[#allocation2 + $0x110] sm:$0x30] %v1225
        %1242 = vst [vmem:[#allocation2 + $0x118] sm:$0x30] %v1226
        %1243 = vst [vmem:[#allocation2 + $0x120] sm:$0x30] %v1227
        %1244 = vst [vmem:[#allocation2 + $0x128] sm:$0x30] %v1228
        %1245 = vst [vmem:[#allocation2 + $0x130] sm:$0x30] %v1229
        %1246 = vst [vmem:[#allocation2 + $0x138] sm:$0x30] %v1230
        %v1247 = vrot.slane %v420, 2
        %v1248 = vrot.slane %v427, 2
        %v1249 = vrot.slane %v428, 2
        %1250 = vrot.lane.b32.xlu0 %v546, 119
        %v1251 = vpop.permute.xlu0 %1250
        %1252 = vrot.lane.b32.xlu0 %v547, 119
        %v1253 = vpop.permute.xlu0 %1252
        %1254 = vrot.lane.b32.xlu0 %v548, 119
        %v1255 = vpop.permute.xlu0 %1254
        %1256 = vrot.lane.b32.xlu0 %v549, 119
        %v1257 = vpop.permute.xlu0 %1256
        %1258 = vrot.lane.b32.xlu0 %v898, 119
        %v1259 = vpop.permute.xlu0 %1258
        %1260 = vrot.lane.b32.xlu0 %v899, 119
        %v1261 = vpop.permute.xlu0 %1260
        %1262 = vrot.lane.b32.xlu0 %v1247, 119
        %v1263 = vpop.permute.xlu0 %1262
        %1264 = vrot.lane.b32.xlu0 %v1248, 119
        %v1265 = vpop.permute.xlu0 %1264
        %1266 = vrot.lane.b32.xlu0 %v1249, 119
        %v1267 = vpop.permute.xlu0 %1266
        %vm1268 = vcmask 973824
        %v1269 = vsel %vm1268, %v1251, %v1253
        %v1270 = vsel %vm1268, %v1253, %v1255
        %v1271 = vsel %vm1268, %v1255, %v1257
        %v1272 = vsel %vm1268, %v1257, %v1259
        %v1273 = vsel %vm1268, %v1259, %v1261
        %v1274 = vsel %vm1268, %v1261, %v1263
        %v1275 = vsel %vm1268, %v1263, %v1265
        %v1276 = vsel %vm1268, %v1265, %v1267
        %1285 = vst [vmem:[#allocation2 + $0x100] sm:$0xc0] %v1269
        %1286 = vst [vmem:[#allocation2 + $0x108] sm:$0xc0] %v1270
        %1287 = vst [vmem:[#allocation2 + $0x110] sm:$0xc0] %v1271
        %1288 = vst [vmem:[#allocation2 + $0x118] sm:$0xc0] %v1272
        %1289 = vst [vmem:[#allocation2 + $0x120] sm:$0xc0] %v1273
        %1290 = vst [vmem:[#allocation2 + $0x128] sm:$0xc0] %v1274
        %1291 = vst [vmem:[#allocation2 + $0x130] sm:$0xc0] %v1275
        %1292 = vst [vmem:[#allocation2 + $0x138] sm:$0xc0] %v1276
        %1293 = vrot.lane.b32.xlu0 %v392, 118
        %v1294 = vpop.permute.xlu0 %1293
        %1295 = vrot.lane.b32.xlu0 %v391, 118
        %v1296 = vpop.permute.xlu0 %1295
        %1297 = vrot.lane.b32.xlu0 %v393, 118
        %v1298 = vpop.permute.xlu0 %1297
        %1299 = vrot.lane.b32.xlu0 %v411, 118
        %v1300 = vpop.permute.xlu0 %1299
        %1301 = vrot.lane.b32.xlu0 %v419, 118
        %v1302 = vpop.permute.xlu0 %1301
        %1303 = vrot.lane.b32.xlu0 %v418, 118
        %v1304 = vpop.permute.xlu0 %1303
        %1305 = vrot.lane.b32.xlu0 %v420, 118
        %v1306 = vpop.permute.xlu0 %1305
        %1307 = vrot.lane.b32.xlu0 %v427, 118
        %v1308 = vpop.permute.xlu0 %1307
        %1309 = vrot.lane.b32.xlu0 %v428, 118
        %v1310 = vpop.permute.xlu0 %1309
        %vm1311 = vcmask 965632
        %v1312 = vsel %vm1311, %v1294, %v1296
        %v1313 = vsel %vm1311, %v1296, %v1298
        %v1314 = vsel %vm1311, %v1298, %v1300
        %v1315 = vsel %vm1311, %v1300, %v1302
        %v1316 = vsel %vm1311, %v1302, %v1304
        %v1317 = vsel %vm1311, %v1304, %v1306
        %v1318 = vsel %vm1311, %v1306, %v1308
        %v1319 = vsel %vm1311, %v1308, %v1310
        %1328 = vst [vmem:[#allocation2 + $0x140] sm:$0x3] %v1312
        %1329 = vst [vmem:[#allocation2 + $0x148] sm:$0x3] %v1313
        %1330 = vst [vmem:[#allocation2 + $0x150] sm:$0x3] %v1314
        %1331 = vst [vmem:[#allocation2 + $0x158] sm:$0x3] %v1315
        %1332 = vst [vmem:[#allocation2 + $0x160] sm:$0x3] %v1316
        %1333 = vst [vmem:[#allocation2 + $0x168] sm:$0x3] %v1317
        %1334 = vst [vmem:[#allocation2 + $0x170] sm:$0x3] %v1318
        %1335 = vst [vmem:[#allocation2 + $0x178] sm:$0x3] %v1319
        %v1336 = vrot.slane %v420, 6
        %v1337 = vrot.slane %v427, 6
        %v1338 = vrot.slane %v428, 6
        %1339 = vrot.lane.b32.xlu0 %v442, 102
        %v1340 = vpop.permute.xlu0 %1339
        %1341 = vrot.lane.b32.xlu0 %v443, 102
        %v1342 = vpop.permute.xlu0 %1341
        %1343 = vrot.lane.b32.xlu0 %v444, 102
        %v1344 = vpop.permute.xlu0 %1343
        %1345 = vrot.lane.b32.xlu0 %v445, 102
        %v1346 = vpop.permute.xlu0 %1345
        %1347 = vrot.lane.b32.xlu0 %v808, 102
        %v1348 = vpop.permute.xlu0 %1347
        %1349 = vrot.lane.b32.xlu0 %v809, 102
        %v1350 = vpop.permute.xlu0 %1349
        %1351 = vrot.lane.b32.xlu0 %v1336, 102
        %v1352 = vpop.permute.xlu0 %1351
        %1353 = vrot.lane.b32.xlu0 %v1337, 102
        %v1354 = vpop.permute.xlu0 %1353
        %1355 = vrot.lane.b32.xlu0 %v1338, 102
        %v1356 = vpop.permute.xlu0 %1355
        %vm1357 = vcmask 834560
        %v1358 = vsel %vm1357, %v1340, %v1342
        %v1359 = vsel %vm1357, %v1342, %v1344
        %v1360 = vsel %vm1357, %v1344, %v1346
        %v1361 = vsel %vm1357, %v1346, %v1348
        %v1362 = vsel %vm1357, %v1348, %v1350
        %v1363 = vsel %vm1357, %v1350, %v1352
        %v1364 = vsel %vm1357, %v1352, %v1354
        %v1365 = vsel %vm1357, %v1354, %v1356
        %1374 = vst [vmem:[#allocation2 + $0x140] sm:$0xc] %v1358
        %1375 = vst [vmem:[#allocation2 + $0x148] sm:$0xc] %v1359
        %1376 = vst [vmem:[#allocation2 + $0x150] sm:$0xc] %v1360
        %1377 = vst [vmem:[#allocation2 + $0x158] sm:$0xc] %v1361
        %1378 = vst [vmem:[#allocation2 + $0x160] sm:$0xc] %v1362
        %1379 = vst [vmem:[#allocation2 + $0x168] sm:$0xc] %v1363
        %1380 = vst [vmem:[#allocation2 + $0x170] sm:$0xc] %v1364
        %1381 = vst [vmem:[#allocation2 + $0x178] sm:$0xc] %v1365
        %1382 = vrot.lane.b32.xlu0 %v494, 101
        %v1383 = vpop.permute.xlu0 %1382
        %1384 = vrot.lane.b32.xlu0 %v495, 101
        %v1385 = vpop.permute.xlu0 %1384
        %1386 = vrot.lane.b32.xlu0 %v496, 101
        %v1387 = vpop.permute.xlu0 %1386
        %1388 = vrot.lane.b32.xlu0 %v497, 101
        %v1389 = vpop.permute.xlu0 %1388
        %1390 = vrot.lane.b32.xlu0 %v853, 101
        %v1391 = vpop.permute.xlu0 %1390
        %1392 = vrot.lane.b32.xlu0 %v854, 101
        %v1393 = vpop.permute.xlu0 %1392
        %1394 = vrot.lane.b32.xlu0 %v1201, 101
        %v1395 = vpop.permute.xlu0 %1394
        %1396 = vrot.lane.b32.xlu0 %v1202, 101
        %v1397 = vpop.permute.xlu0 %1396
        %1398 = vrot.lane.b32.xlu0 %v1203, 101
        %v1399 = vpop.permute.xlu0 %1398
        %vm1400 = vcmask 826368
        %v1401 = vsel %vm1400, %v1383, %v1385
        %v1402 = vsel %vm1400, %v1385, %v1387
        %v1403 = vsel %vm1400, %v1387, %v1389
        %v1404 = vsel %vm1400, %v1389, %v1391
        %v1405 = vsel %vm1400, %v1391, %v1393
        %v1406 = vsel %vm1400, %v1393, %v1395
        %v1407 = vsel %vm1400, %v1395, %v1397
        %v1408 = vsel %vm1400, %v1397, %v1399
        %1417 = vst [vmem:[#allocation2 + $0x140] sm:$0x30] %v1401
        %1418 = vst [vmem:[#allocation2 + $0x148] sm:$0x30] %v1402
        %1419 = vst [vmem:[#allocation2 + $0x150] sm:$0x30] %v1403
        %1420 = vst [vmem:[#allocation2 + $0x158] sm:$0x30] %v1404
        %1421 = vst [vmem:[#allocation2 + $0x160] sm:$0x30] %v1405
        %1422 = vst [vmem:[#allocation2 + $0x168] sm:$0x30] %v1406
        %1423 = vst [vmem:[#allocation2 + $0x170] sm:$0x30] %v1407
        %1424 = vst [vmem:[#allocation2 + $0x178] sm:$0x30] %v1408
        %1425 = vrot.lane.b32.xlu0 %v546, 100
        %v1426 = vpop.permute.xlu0 %1425
        %1427 = vrot.lane.b32.xlu0 %v547, 100
        %v1428 = vpop.permute.xlu0 %1427
        %1429 = vrot.lane.b32.xlu0 %v548, 100
        %v1430 = vpop.permute.xlu0 %1429
        %1431 = vrot.lane.b32.xlu0 %v549, 100
        %v1432 = vpop.permute.xlu0 %1431
        %1433 = vrot.lane.b32.xlu0 %v898, 100
        %v1434 = vpop.permute.xlu0 %1433
        %1435 = vrot.lane.b32.xlu0 %v899, 100
        %v1436 = vpop.permute.xlu0 %1435
        %1437 = vrot.lane.b32.xlu0 %v1247, 100
        %v1438 = vpop.permute.xlu0 %1437
        %1439 = vrot.lane.b32.xlu0 %v1248, 100
        %v1440 = vpop.permute.xlu0 %1439
        %1441 = vrot.lane.b32.xlu0 %v1249, 100
        %v1442 = vpop.permute.xlu0 %1441
        %vm1443 = vcmask 818176
        %v1444 = vsel %vm1443, %v1426, %v1428
        %v1445 = vsel %vm1443, %v1428, %v1430
        %v1446 = vsel %vm1443, %v1430, %v1432
        %v1447 = vsel %vm1443, %v1432, %v1434
        %v1448 = vsel %vm1443, %v1434, %v1436
        %v1449 = vsel %vm1443, %v1436, %v1438
        %v1450 = vsel %vm1443, %v1438, %v1440
        %v1451 = vsel %vm1443, %v1440, %v1442
        %1460 = vst [vmem:[#allocation2 + $0x140] sm:$0xc0] %v1444
        %1461 = vst [vmem:[#allocation2 + $0x148] sm:$0xc0] %v1445
        %1462 = vst [vmem:[#allocation2 + $0x150] sm:$0xc0] %v1446
        %1463 = vst [vmem:[#allocation2 + $0x158] sm:$0xc0] %v1447
        %1464 = vst [vmem:[#allocation2 + $0x160] sm:$0xc0] %v1448
        %1465 = vst [vmem:[#allocation2 + $0x168] sm:$0xc0] %v1449
        %1466 = vst [vmem:[#allocation2 + $0x170] sm:$0xc0] %v1450
        %1467 = vst [vmem:[#allocation2 + $0x178] sm:$0xc0] %v1451
        %1468 = vrot.lane.b32.xlu0 %v392, 84
        %v1469 = vpop.permute.xlu0 %1468
        %1470 = vrot.lane.b32.xlu0 %v391, 84
        %v1471 = vpop.permute.xlu0 %1470
        %1472 = vrot.lane.b32.xlu0 %v393, 84
        %v1473 = vpop.permute.xlu0 %1472
        %1474 = vrot.lane.b32.xlu0 %v411, 84
        %v1475 = vpop.permute.xlu0 %1474
        %1476 = vrot.lane.b32.xlu0 %v419, 84
        %v1477 = vpop.permute.xlu0 %1476
        %1478 = vrot.lane.b32.xlu0 %v418, 84
        %v1479 = vpop.permute.xlu0 %1478
        %1480 = vrot.lane.b32.xlu0 %v420, 84
        %v1481 = vpop.permute.xlu0 %1480
        %1482 = vrot.lane.b32.xlu0 %v427, 84
        %v1483 = vpop.permute.xlu0 %1482
        %1484 = vrot.lane.b32.xlu0 %v428, 84
        %v1485 = vpop.permute.xlu0 %1484
        %vm1486 = vcmask 687104
        %v1487 = vsel %vm1486, %v1469, %v1471
        %v1488 = vsel %vm1486, %v1471, %v1473
        %v1489 = vsel %vm1486, %v1473, %v1475
        %v1490 = vsel %vm1486, %v1475, %v1477
        %v1491 = vsel %vm1486, %v1477, %v1479
        %v1492 = vsel %vm1486, %v1479, %v1481
        %v1493 = vsel %vm1486, %v1481, %v1483
        %v1494 = vsel %vm1486, %v1483, %v1485
        %1503 = vst [vmem:[#allocation2 + $0x180] sm:$0x3] %v1487
        %1504 = vst [vmem:[#allocation2 + $0x188] sm:$0x3] %v1488
        %1505 = vst [vmem:[#allocation2 + $0x190] sm:$0x3] %v1489
        %1506 = vst [vmem:[#allocation2 + $0x198] sm:$0x3] %v1490
        %1507 = vst [vmem:[#allocation2 + $0x1a0] sm:$0x3] %v1491
        %1508 = vst [vmem:[#allocation2 + $0x1a8] sm:$0x3] %v1492
        %1509 = vst [vmem:[#allocation2 + $0x1b0] sm:$0x3] %v1493
        %1510 = vst [vmem:[#allocation2 + $0x1b8] sm:$0x3] %v1494
        %1511 = vrot.lane.b32.xlu0 %v442, 83
        %v1512 = vpop.permute.xlu0 %1511
        %1513 = vrot.lane.b32.xlu0 %v443, 83
        %v1514 = vpop.permute.xlu0 %1513
        %1515 = vrot.lane.b32.xlu0 %v444, 83
        %v1516 = vpop.permute.xlu0 %1515
        %1517 = vrot.lane.b32.xlu0 %v445, 83
        %v1518 = vpop.permute.xlu0 %1517
        %1519 = vrot.lane.b32.xlu0 %v808, 83
        %v1520 = vpop.permute.xlu0 %1519
        %1521 = vrot.lane.b32.xlu0 %v809, 83
        %v1522 = vpop.permute.xlu0 %1521
        %1523 = vrot.lane.b32.xlu0 %v1336, 83
        %v1524 = vpop.permute.xlu0 %1523
        %1525 = vrot.lane.b32.xlu0 %v1337, 83
        %v1526 = vpop.permute.xlu0 %1525
        %1527 = vrot.lane.b32.xlu0 %v1338, 83
        %v1528 = vpop.permute.xlu0 %1527
        %vm1529 = vcmask 678912
        %v1530 = vsel %vm1529, %v1512, %v1514
        %v1531 = vsel %vm1529, %v1514, %v1516
        %v1532 = vsel %vm1529, %v1516, %v1518
        %v1533 = vsel %vm1529, %v1518, %v1520
        %v1534 = vsel %vm1529, %v1520, %v1522
        %v1535 = vsel %vm1529, %v1522, %v1524
        %v1536 = vsel %vm1529, %v1524, %v1526
        %v1537 = vsel %vm1529, %v1526, %v1528
        %1546 = vst [vmem:[#allocation2 + $0x180] sm:$0xc] %v1530
        %1547 = vst [vmem:[#allocation2 + $0x188] sm:$0xc] %v1531
        %1548 = vst [vmem:[#allocation2 + $0x190] sm:$0xc] %v1532
        %1549 = vst [vmem:[#allocation2 + $0x198] sm:$0xc] %v1533
        %1550 = vst [vmem:[#allocation2 + $0x1a0] sm:$0xc] %v1534
        %1551 = vst [vmem:[#allocation2 + $0x1a8] sm:$0xc] %v1535
        %1552 = vst [vmem:[#allocation2 + $0x1b0] sm:$0xc] %v1536
        %1553 = vst [vmem:[#allocation2 + $0x1b8] sm:$0xc] %v1537
        %1554 = vrot.lane.b32.xlu0 %v494, 82
        %v1555 = vpop.permute.xlu0 %1554
        %1556 = vrot.lane.b32.xlu0 %v495, 82
        %v1557 = vpop.permute.xlu0 %1556
        %1558 = vrot.lane.b32.xlu0 %v496, 82
        %v1559 = vpop.permute.xlu0 %1558
        %1560 = vrot.lane.b32.xlu0 %v497, 82
        %v1561 = vpop.permute.xlu0 %1560
        %1562 = vrot.lane.b32.xlu0 %v853, 82
        %v1563 = vpop.permute.xlu0 %1562
        %1564 = vrot.lane.b32.xlu0 %v854, 82
        %v1565 = vpop.permute.xlu0 %1564
        %1566 = vrot.lane.b32.xlu0 %v1201, 82
        %v1567 = vpop.permute.xlu0 %1566
        %1568 = vrot.lane.b32.xlu0 %v1202, 82
        %v1569 = vpop.permute.xlu0 %1568
        %1570 = vrot.lane.b32.xlu0 %v1203, 82
        %v1571 = vpop.permute.xlu0 %1570
        %vm1572 = vcmask 670720
        %v1573 = vsel %vm1572, %v1555, %v1557
        %v1574 = vsel %vm1572, %v1557, %v1559
        %v1575 = vsel %vm1572, %v1559, %v1561
        %v1576 = vsel %vm1572, %v1561, %v1563
        %v1577 = vsel %vm1572, %v1563, %v1565
        %v1578 = vsel %vm1572, %v1565, %v1567
        %v1579 = vsel %vm1572, %v1567, %v1569
        %v1580 = vsel %vm1572, %v1569, %v1571
        %1589 = vst [vmem:[#allocation2 + $0x180] sm:$0x30] %v1573
        %1590 = vst [vmem:[#allocation2 + $0x188] sm:$0x30] %v1574
        %1591 = vst [vmem:[#allocation2 + $0x190] sm:$0x30] %v1575
        %1592 = vst [vmem:[#allocation2 + $0x198] sm:$0x30] %v1576
        %1593 = vst [vmem:[#allocation2 + $0x1a0] sm:$0x30] %v1577
        %1594 = vst [vmem:[#allocation2 + $0x1a8] sm:$0x30] %v1578
        %1595 = vst [vmem:[#allocation2 + $0x1b0] sm:$0x30] %v1579
        %1596 = vst [vmem:[#allocation2 + $0x1b8] sm:$0x30] %v1580
        %1597 = vst [vmem:[#allocation2 + $0x180] sm:$0xc0] 0
        %1598 = vst [vmem:[#allocation2 + $0x188] sm:$0xc0] 0
        %1599 = vst [vmem:[#allocation2 + $0x190] sm:$0xc0] 0
        %1600 = vst [vmem:[#allocation2 + $0x198] sm:$0xc0] 0
        %1601 = vst [vmem:[#allocation2 + $0x1a0] sm:$0xc0] 0
        %1602 = vst [vmem:[#allocation2 + $0x1a8] sm:$0xc0] 0
        %1603 = vst [vmem:[#allocation2 + $0x1b0] sm:$0xc0] 0
        %1604 = vst [vmem:[#allocation2 + $0x1b8] sm:$0xc0] 0
        %v1605 = vld [vmem:[%s2] sm:$0xf]
        %v1606 = vld [vmem:[#allocation2] sm:$0xff]
        %v1607 = vld [vmem:[#allocation2 + $0x8] sm:$0xff]
        %v1608 = vld [vmem:[#allocation2 + $0x10] sm:$0xff]
        %v1609 = vld [vmem:[#allocation2 + $0x18] sm:$0xff]
        %v1610 = vld [vmem:[#allocation2 + $0x20] sm:$0xff]
        %v1611 = vld [vmem:[#allocation2 + $0x28] sm:$0xff]
        %v1612 = vld [vmem:[#allocation2 + $0x30] sm:$0xff]
        %v1613 = vld [vmem:[#allocation2 + $0x38] sm:$0xff]
        %v1614 = vld [vmem:[#allocation2 + $0x40] sm:$0xff]
        %v1615 = vld [vmem:[#allocation2 + $0x48] sm:$0xff]
        %v1616 = vld [vmem:[#allocation2 + $0x50] sm:$0xff]
        %v1617 = vld [vmem:[#allocation2 + $0x58] sm:$0xff]
        %v1618 = vld [vmem:[#allocation2 + $0x60] sm:$0xff]
        %v1619 = vld [vmem:[#allocation2 + $0x68] sm:$0xff]
        %v1620 = vld [vmem:[#allocation2 + $0x70] sm:$0xff]
        %v1621 = vld [vmem:[#allocation2 + $0x78] sm:$0xff]
        %v1622 = vld [vmem:[#allocation2 + $0x80] sm:$0xff]
        %v1623 = vld [vmem:[#allocation2 + $0x88] sm:$0xff]
        %v1624 = vld [vmem:[#allocation2 + $0x90] sm:$0xff]
        %v1625 = vld [vmem:[#allocation2 + $0x98] sm:$0xff]
        %v1626 = vld [vmem:[#allocation2 + $0xa0] sm:$0xff]
        %v1627 = vld [vmem:[#allocation2 + $0xa8] sm:$0xff]
        %v1628 = vld [vmem:[#allocation2 + $0xb0] sm:$0xff]
        %v1629 = vld [vmem:[#allocation2 + $0xb8] sm:$0xff]
        %v1630 = vld [vmem:[#allocation2 + $0xc0] sm:$0xff]
        %v1631 = vld [vmem:[#allocation2 + $0xc8] sm:$0xff]
        %v1632 = vld [vmem:[#allocation2 + $0xd0] sm:$0xff]
        %v1633 = vld [vmem:[#allocation2 + $0xd8] sm:$0xff]
        %v1634 = vld [vmem:[#allocation2 + $0xe0] sm:$0xff]
        %v1635 = vld [vmem:[#allocation2 + $0xe8] sm:$0xff]
        %v1636 = vld [vmem:[#allocation2 + $0xf0] sm:$0xff]
        %v1637 = vld [vmem:[#allocation2 + $0xf8] sm:$0xff]
        %v1638 = vld [vmem:[#allocation2 + $0x100] sm:$0xff]
        %v1639 = vld [vmem:[#allocation2 + $0x108] sm:$0xff]
        %v1640 = vld [vmem:[#allocation2 + $0x110] sm:$0xff]
        %v1641 = vld [vmem:[#allocation2 + $0x118] sm:$0xff]
        %v1642 = vld [vmem:[#allocation2 + $0x120] sm:$0xff]
        %v1643 = vld [vmem:[#allocation2 + $0x128] sm:$0xff]
        %v1644 = vld [vmem:[#allocation2 + $0x130] sm:$0xff]
        %v1645 = vld [vmem:[#allocation2 + $0x138] sm:$0xff]
        %v1646 = vld [vmem:[#allocation2 + $0x140] sm:$0xff]
        %v1647 = vld [vmem:[#allocation2 + $0x148] sm:$0xff]
        %v1648 = vld [vmem:[#allocation2 + $0x150] sm:$0xff]
        %v1649 = vld [vmem:[#allocation2 + $0x158] sm:$0xff]
        %v1650 = vld [vmem:[#allocation2 + $0x160] sm:$0xff]
        %v1651 = vld [vmem:[#allocation2 + $0x168] sm:$0xff]
        %v1652 = vld [vmem:[#allocation2 + $0x170] sm:$0xff]
        %v1653 = vld [vmem:[#allocation2 + $0x178] sm:$0xff]
        %v1654 = vld [vmem:[#allocation2 + $0x180] sm:$0xff]
        %v1655 = vld [vmem:[#allocation2 + $0x188] sm:$0xff]
        %v1656 = vld [vmem:[#allocation2 + $0x190] sm:$0xff]
        %v1657 = vld [vmem:[#allocation2 + $0x198] sm:$0xff]
        %v1658 = vld [vmem:[#allocation2 + $0x1a0] sm:$0xff]
        %v1659 = vld [vmem:[#allocation2 + $0x1a8] sm:$0xff]
        %v1660 = vld [vmem:[#allocation2 + $0x1b0] sm:$0xff]
        %v1661 = vld [vmem:[#allocation2 + $0x1b8] sm:$0xff]
        %vm1662 = vcmask 916480
        %v1664 = vsel %vm1662, %v1605, 0
        %1666 = vmatprep.subr.bf16.mxu0 %v1607
        %1667 = vmatpush1.bf16.msra.mxu0 %v1606
        %1668 = vmatprep.subr.bf16.mxu0 %v1615
        %1669 = vmatpush1.bf16.msra.mxu0 %v1614
        %1670 = vmatprep.subr.bf16.mxu0 %v1623
        %1671 = vmatpush1.bf16.msra.mxu0 %v1622
        %1672 = vmatprep.subr.bf16.mxu0 %v1631
        %1673 = vmatpush1.bf16.msra.mxu0 %v1630
        %1674 = vmatprep.subr.bf16.mxu0 %v1639
        %1675 = vmatpush1.bf16.msra.mxu0 %v1638
        %1676 = vmatprep.subr.bf16.mxu0 %v1647
        %1677 = vmatpush1.bf16.msra.mxu0 %v1646
        %1678 = vmatprep.subr.bf16.mxu0 %v1655
        %1679 = vmatpush1.bf16.msra.mxu0 %v1654
        %1680 = vmatprep.subr.bf16.mxu0 0
        %1681 = vmatpush1.bf16.msra.mxu0 0
        %1682 = vmatprep.subr.bf16.mxu0 0
        %1683 = vmatpush1.bf16.msra.mxu0 0
        %1684 = vmatprep.subr.bf16.mxu0 0
        %1685 = vmatpush1.bf16.msra.mxu0 0
        %1686 = vmatprep.subr.bf16.mxu0 0
        %1687 = vmatpush1.bf16.msra.mxu0 0
        %1688 = vmatprep.subr.bf16.mxu0 0
        %1689 = vmatpush1.bf16.msra.mxu0 0
        %1690 = vmatprep.subr.bf16.mxu0 0
        %1691 = vmatpush1.bf16.msra.mxu0 0
        %1692 = vmatprep.subr.bf16.mxu0 0
        %1693 = vmatpush1.bf16.msra.mxu0 0
        %1694 = vmatprep.subr.bf16.mxu0 0
        %1695 = vmatpush1.bf16.msra.mxu0 0
        %1696 = vmatprep.subr.bf16.mxu0 0
        %1697 = vmatpush1.bf16.msra.mxu0 0
        %1698 = vmatprep.mubr.bf16.mxu0 0
        %1699 = vmatmul.mubr.bf16.gmra.mrb[0].mxu0 %v1664
        %v1700 = vpop.f32.mrb[0].mxu0
        %v1701 = vadd.f32 0.0, %v1700
        %v1702 = vpop.f32.mrb[0].mxu0
        %v1703 = vadd.f32 0.0, %v1702
        %v1704 = vpop.f32.mrb[0].mxu0
        %v1705 = vpop.f32.mrb[0].mxu0
        %1706 = vdwg.mxu0
        %1707 = vmatprep.subr.bf16.mxu0 %v1609
        %1708 = vmatpush1.bf16.msra.mxu0 %v1608
        %1709 = vmatprep.subr.bf16.mxu0 %v1617
        %1710 = vmatpush1.bf16.msra.mxu0 %v1616
        %1711 = vmatprep.subr.bf16.mxu0 %v1625
        %1712 = vmatpush1.bf16.msra.mxu0 %v1624
        %1713 = vmatprep.subr.bf16.mxu0 %v1633
        %1714 = vmatpush1.bf16.msra.mxu0 %v1632
        %1715 = vmatprep.subr.bf16.mxu0 %v1641
        %1716 = vmatpush1.bf16.msra.mxu0 %v1640
        %1717 = vmatprep.subr.bf16.mxu0 %v1649
        %1718 = vmatpush1.bf16.msra.mxu0 %v1648
        %1719 = vmatprep.subr.bf16.mxu0 %v1657
        %1720 = vmatpush1.bf16.msra.mxu0 %v1656
        %1721 = vmatprep.subr.bf16.mxu0 0
        %1722 = vmatpush1.bf16.msra.mxu0 0
        %1723 = vmatprep.subr.bf16.mxu0 0
        %1724 = vmatpush1.bf16.msra.mxu0 0
        %1725 = vmatprep.subr.bf16.mxu0 0
        %1726 = vmatpush1.bf16.msra.mxu0 0
        %1727 = vmatprep.subr.bf16.mxu0 0
        %1728 = vmatpush1.bf16.msra.mxu0 0
        %1729 = vmatprep.subr.bf16.mxu0 0
        %1730 = vmatpush1.bf16.msra.mxu0 0
        %1731 = vmatprep.subr.bf16.mxu0 0
        %1732 = vmatpush1.bf16.msra.mxu0 0
        %1733 = vmatprep.subr.bf16.mxu0 0
        %1734 = vmatpush1.bf16.msra.mxu0 0
        %1735 = vmatprep.subr.bf16.mxu0 0
        %1736 = vmatpush1.bf16.msra.mxu0 0
        %1737 = vmatprep.subr.bf16.mxu0 0
        %1738 = vmatpush1.bf16.msra.mxu0 0
        %1739 = vmatprep.mubr.bf16.mxu0 0
        %1740 = vmatmul.mubr.bf16.gmra.mrb[0].mxu0 %v1664
        %v1741 = vpop.f32.mrb[0].mxu0
        %v1742 = vadd.f32 0.0, %v1741
        %v1743 = vpop.f32.mrb[0].mxu0
        %v1744 = vadd.f32 0.0, %v1743
        %v1745 = vpop.f32.mrb[0].mxu0
        %v1746 = vpop.f32.mrb[0].mxu0
        %1747 = vdwg.mxu0
        %1748 = vmatprep.subr.bf16.mxu0 %v1611
        %1749 = vmatpush1.bf16.msra.mxu0 %v1610
        %1750 = vmatprep.subr.bf16.mxu0 %v1619
        %1751 = vmatpush1.bf16.msra.mxu0 %v1618
        %1752 = vmatprep.subr.bf16.mxu0 %v1627
        %1753 = vmatpush1.bf16.msra.mxu0 %v1626
        %1754 = vmatprep.subr.bf16.mxu0 %v1635
        %1755 = vmatpush1.bf16.msra.mxu0 %v1634
        %1756 = vmatprep.subr.bf16.mxu0 %v1643
        %1757 = vmatpush1.bf16.msra.mxu0 %v1642
        %1758 = vmatprep.subr.bf16.mxu0 %v1651
        %1759 = vmatpush1.bf16.msra.mxu0 %v1650
        %1760 = vmatprep.subr.bf16.mxu0 %v1659
        %1761 = vmatpush1.bf16.msra.mxu0 %v1658
        %1762 = vmatprep.subr.bf16.mxu0 0
        %1763 = vmatpush1.bf16.msra.mxu0 0
        %1764 = vmatprep.subr.bf16.mxu0 0
        %1765 = vmatpush1.bf16.msra.mxu0 0
        %1766 = vmatprep.subr.bf16.mxu0 0
        %1767 = vmatpush1.bf16.msra.mxu0 0
        %1768 = vmatprep.subr.bf16.mxu0 0
        %1769 = vmatpush1.bf16.msra.mxu0 0
        %1770 = vmatprep.subr.bf16.mxu0 0
        %1771 = vmatpush1.bf16.msra.mxu0 0
        %1772 = vmatprep.subr.bf16.mxu0 0
        %1773 = vmatpush1.bf16.msra.mxu0 0
        %1774 = vmatprep.subr.bf16.mxu0 0
        %1775 = vmatpush1.bf16.msra.mxu0 0
        %1776 = vmatprep.subr.bf16.mxu0 0
        %1777 = vmatpush1.bf16.msra.mxu0 0
        %1778 = vmatprep.subr.bf16.mxu0 0
        %1779 = vmatpush1.bf16.msra.mxu0 0
        %1780 = vmatprep.mubr.bf16.mxu0 0
        %1781 = vmatmul.mubr.bf16.gmra.mrb[0].mxu0 %v1664
        %v1782 = vpop.f32.mrb[0].mxu0
        %v1783 = vadd.f32 0.0, %v1782
        %v1784 = vpop.f32.mrb[0].mxu0
        %v1785 = vadd.f32 0.0, %v1784
        %v1786 = vpop.f32.mrb[0].mxu0
        %v1787 = vpop.f32.mrb[0].mxu0
        %1788 = vdwg.mxu0
        %1789 = vmatprep.subr.bf16.mxu0 %v1613
        %1790 = vmatpush1.bf16.msra.mxu0 %v1612
        %1791 = vmatprep.subr.bf16.mxu0 %v1621
        %1792 = vmatpush1.bf16.msra.mxu0 %v1620
        %1793 = vmatprep.subr.bf16.mxu0 %v1629
        %1794 = vmatpush1.bf16.msra.mxu0 %v1628
        %1795 = vmatprep.subr.bf16.mxu0 %v1637
        %1796 = vmatpush1.bf16.msra.mxu0 %v1636
        %1797 = vmatprep.subr.bf16.mxu0 %v1645
        %1798 = vmatpush1.bf16.msra.mxu0 %v1644
        %1799 = vmatprep.subr.bf16.mxu0 %v1653
        %1800 = vmatpush1.bf16.msra.mxu0 %v1652
        %1801 = vmatprep.subr.bf16.mxu0 %v1661
        %1802 = vmatpush1.bf16.msra.mxu0 %v1660
        %1803 = vmatprep.subr.bf16.mxu0 0
        %1804 = vmatpush1.bf16.msra.mxu0 0
        %1805 = vmatprep.subr.bf16.mxu0 0
        %1806 = vmatpush1.bf16.msra.mxu0 0
        %1807 = vmatprep.subr.bf16.mxu0 0
        %1808 = vmatpush1.bf16.msra.mxu0 0
        %1809 = vmatprep.subr.bf16.mxu0 0
        %1810 = vmatpush1.bf16.msra.mxu0 0
        %1811 = vmatprep.subr.bf16.mxu0 0
        %1812 = vmatpush1.bf16.msra.mxu0 0
        %1813 = vmatprep.subr.bf16.mxu0 0
        %1814 = vmatpush1.bf16.msra.mxu0 0
        %1815 = vmatprep.subr.bf16.mxu0 0
        %1816 = vmatpush1.bf16.msra.mxu0 0
        %1817 = vmatprep.subr.bf16.mxu0 0
        %1818 = vmatpush1.bf16.msra.mxu0 0
        %1819 = vmatprep.subr.bf16.mxu0 0
        %1820 = vmatpush1.bf16.msra.mxu0 0
        %1821 = vmatprep.mubr.bf16.mxu0 0
        %1822 = vmatmul.mubr.bf16.gmra.mrb[0].mxu0 %v1664
        %v1823 = vpop.f32.mrb[0].mxu0
        %v1824 = vadd.f32 0.0, %v1823
        %v1825 = vpop.f32.mrb[0].mxu0
        %v1826 = vadd.f32 0.0, %v1825
        %v1827 = vpop.f32.mrb[0].mxu0
        %v1828 = vpop.f32.mrb[0].mxu0
        %1829 = vdwg.mxu0
        %1830 = vst [vmem:[%s339] sm:$0xff] %v1701
        %1831 = vst [vmem:[%s339 + $0x8] sm:$0xff] %v1703
        %1832 = vst [vmem:[%s339 + $0x10] sm:$0xff] %v1742
        %1833 = vst [vmem:[%s339 + $0x18] sm:$0xff] %v1744
        %1834 = vst [vmem:[%s339 + $0x20] sm:$0xff] %v1783
        %1835 = vst [vmem:[%s339 + $0x28] sm:$0xff] %v1785
        %1836 = vst [vmem:[%s339 + $0x30] sm:$0xff] %v1824
        %1837 = vst [vmem:[%s339 + $0x38] sm:$0xff] %v1826
        %v1838 = vld [vmem:[%s305] sm:$0xff]
        %v1840 = vlaneseq
        %v1841 = vshrl.u32 %v1840, 7
        %v1842 = vsub.s32 0, %v1841
        %v1843 = vrot.slane %v1838, %v1842
        %v1844 = vlaneseq
        %v1845 = vshrl.u32 %v1844, 7
        %v1846 = vsub.s32 1, %v1845
        %v1847 = vrot.slane %v1838, %v1846
        %v1848 = vlaneseq
        %v1849 = vshrl.u32 %v1848, 7
        %v1850 = vsub.s32 2, %v1849
        %v1851 = vrot.slane %v1838, %v1850
        %v1852 = vlaneseq
        %v1853 = vshrl.u32 %v1852, 7
        %v1854 = vsub.s32 3, %v1853
        %v1855 = vrot.slane %v1838, %v1854
        %v1856 = vlaneseq
        %v1857 = vshrl.u32 %v1856, 7
        %v1858 = vsub.s32 4, %v1857
        %v1859 = vrot.slane %v1838, %v1858
        %v1860 = vlaneseq
        %v1861 = vshrl.u32 %v1860, 7
        %v1862 = vsub.s32 5, %v1861
        %v1863 = vrot.slane %v1838, %v1862
        %v1864 = vlaneseq
        %v1865 = vshrl.u32 %v1864, 7
        %v1866 = vsub.s32 6, %v1865
        %v1867 = vrot.slane %v1838, %v1866
        %v1868 = vlaneseq
        %v1869 = vshrl.u32 %v1868, 7
        %v1870 = vsub.s32 7, %v1869
        %v1871 = vrot.slane %v1838, %v1870
        %v1880 = vmul.f32 %v1701, %v1843
        %v1881 = vmul.f32 %v1703, %v1847
        %v1882 = vmul.f32 %v1742, %v1851
        %v1883 = vmul.f32 %v1744, %v1855
        %v1884 = vmul.f32 %v1783, %v1859
        %v1885 = vmul.f32 %v1785, %v1863
        %v1886 = vmul.f32 %v1824, %v1867
        %v1887 = vmul.f32 %v1826, %v1871
        %v1888 = vadd.f32 %v1880, %v1881
        %v1889 = vadd.f32 %v1888, %v1882
        %v1890 = vadd.f32 %v1889, %v1883
        %v1891 = vadd.f32 %v1890, %v1884
        %v1892 = vadd.f32 %v1891, %v1885
        %v1893 = vadd.f32 %v1892, %v1886
        %v1894 = vadd.f32 %v1893, %v1887
        %1895 = vadd.xlane.f32.xlu0 %v1894
        %v1896 = vpop.xlane.xlu0 %1895
        %v1897 = vmul.f32 %v1880, %v1701
        %v1898 = vmul.f32 %v1881, %v1703
        %v1899 = vmul.f32 %v1882, %v1742
        %v1900 = vmul.f32 %v1883, %v1744
        %v1901 = vmul.f32 %v1884, %v1783
        %v1902 = vmul.f32 %v1885, %v1785
        %v1903 = vmul.f32 %v1886, %v1824
        %v1904 = vmul.f32 %v1887, %v1826
        %v1905 = vadd.f32 %v1897, %v1898
        %v1906 = vadd.f32 %v1905, %v1899
        %v1907 = vadd.f32 %v1906, %v1900
        %v1908 = vadd.f32 %v1907, %v1901
        %v1909 = vadd.f32 %v1908, %v1902
        %v1910 = vadd.f32 %v1909, %v1903
        %v1911 = vadd.f32 %v1910, %v1904
        %1912 = vadd.xlane.f32.xlu0 %v1911
        %v1913 = vpop.xlane.xlu0 %1912
        %p1914 = scmp.eq.s32.totalorder %s31, 0
        // Predicated region
        $region49: #{tpu_custom_call.1} parent=35 // pred_check
          %p1915 = pneg %p1914
        $region50: #{tpu_custom_call.1} parent=35 // pred_check_branch
          %1917 = sbr.rel (%p1915) target = $region52
        $region51: #{tpu_custom_call.1} parent=35 // pred_region
          %vm1918 = vcmask 15360
          %1919 = vst.msk [vmem:[%s352] sm:$0xff] %vm1918, 0.0
        $region52: #{tpu_custom_call.1} parent=35 // pred_fallthru
          _
        %v1920 = vld [vmem:[%s352] sm:$0xff]
        %vm1921 = vcmask 7168
        %v1922 = vsel %vm1921, %v1896, %v1913
        %v1923 = vadd.f32 %v1920, %v1922
        %vm1924 = vcmask 15360
        %1925 = vst.msk [vmem:[%s352] sm:$0xff] %vm1924, %v1923
        %s1926 = sand.u32 %s153, 1
        %s1927 = scalar_lea.sflag [#allocation5], %s1926
        %s1928 = sand.u32 %s153, 1
        %s1929 = smul.addr %s1928, 64
        %s1930 = scalar_lea.vmem [#allocation9], %s1929
        %p1931 = scmp.lt.s32.totalorder %s30, 1
        %s1932 = scalar_select %p1931, %s30, 1
        %s1933 = smul.addr %s1932, 8
        %s1934 = scalar_lea.vmem %s5, %s1933
        // Predicated region
        $region53: #{tpu_custom_call.1} parent=35 // pred_check
          %p1935 = pneg %p163
        $region54: #{tpu_custom_call.1} parent=35 // pred_check_branch
          %1937 = sbr.rel (%p1935) target = $region56
        $region55: #{tpu_custom_call.1} parent=35 // pred_region
          %s1938 = smul.u32 8, %s31
          %s1940 = ssub.s32 1024, 1024
          %1941 = vsyncadd %s1927, %s1940
          %s1942 = smul.addr %s30, 48
          %s1943 = sadd.s32 %s1938, %s1942
          %s1944 = smul.addr %s1943, 128
          %s1945 = scalar_lea.hbm %s4, %s1944
          %s1947 = sshll.u32 %s1930, 4
          %s1948 = int_to_ptr.vmem [resolvable:$true] %s1947
          %1950 = dma.vmem_to_hbm [thread:$0]  %s1948, 1024, %s1945, %s1927
        $region56: #{tpu_custom_call.1} parent=35 // pred_fallthru
          _
        // Predicated region
        $region57: #{tpu_custom_call.1} parent=35 // pred_check
          %p1951 = pneg %p189
        $region58: #{tpu_custom_call.1} parent=35 // pred_check_branch
          %1953 = sbr.rel (%p1951) target = $region60
        $region59: #{tpu_custom_call.1} parent=35 // pred_region
          _
        $region60: #{tpu_custom_call.1} parent=35 // pred_fallthru
          _
      $region36: #{tpu_custom_call.1} parent=5 // pred_fallthru
        _
      %p1954 = scmp.le.s32.totalorder 2, %s21
      // Predicated region
      $region61: #{tpu_custom_call.1} parent=5 // pred_check
        %p1955 = pneg %p1954
      $region62: #{tpu_custom_call.1} parent=5 // pred_check_branch
        %1957 = sbr.rel (%p1955) target = $region64
      $region63: #{tpu_custom_call.1} parent=5 // pred_region
        %s1958 = ssub.s32 %s21, 2
        // Predicated region
        $region65: #{tpu_custom_call.1} parent=63 // pred_check
          %p1959 = pneg %p169
        $region66: #{tpu_custom_call.1} parent=63 // pred_check_branch
          %1961 = sbr.rel (%p1959) target = $region68
        $region67: #{tpu_custom_call.1} parent=63 // pred_region
          %s1962 = sand.u32 %s154, 1
          %s1963 = scalar_lea.sflag [#allocation5], %s1962
          %s1964 = sand.u32 %s154, 1
          %s1965 = smul.addr %s1964, 64
          %s1966 = scalar_lea.vmem [#allocation9], %s1965
          %1967 = dma.done %s1963, 1024
        $region68: #{tpu_custom_call.1} parent=63 // pred_fallthru
          _
        // Predicated region
        $region69: #{tpu_custom_call.1} parent=63 // pred_check
          %p1968 = pneg %p195
        $region70: #{tpu_custom_call.1} parent=63 // pred_check_branch
          %1970 = sbr.rel (%p1968) target = $region72
        $region71: #{tpu_custom_call.1} parent=63 // pred_region
          %p1971 = scmp.lt.s32.totalorder %s32, 1
          %s1972 = scalar_select %p1971, %s32, 1
          %s1973 = smul.addr %s1972, 8
          %s1974 = scalar_lea.vmem %s5, %s1973
        $region72: #{tpu_custom_call.1} parent=63 // pred_fallthru
          _
      $region64: #{tpu_custom_call.1} parent=5 // pred_fallthru
        _
    $region6: #{tpu_custom_call.1} parent=1 // loop_footer
      %s25 = sadd.s32 1, %s21
    $region7: #{tpu_custom_call.1} parent=1 // loop_footer_branch
      %20 = sbr.rel target = $region3
    $region8: #{tpu_custom_call.1} parent=1 // loop_exit
      _
    %1975 = vsyncpa [#allocation4], 1
    %s1976 = scalar_lea.sflag [#allocation4], 1
    %1977 = vsyncpa %s1976, 1
    %1978 = vsyncpa [#allocation7], 1
    %s1979 = scalar_lea.sflag [#allocation7], 1
    %1980 = vsyncpa %s1979, 1
    %1981 = vsyncpa [#allocation5], 1
    %s1982 = scalar_lea.sflag [#allocation5], 1
    %1983 = vsyncpa %s1982, 1

</llo_original>
